<compile_context>
chip_gen: v7x
topology: tpu7x:2x2x1
jax: 0.10.0
libtpu: 0.0.40
codegen_flags: <defaults>
</compile_context>

<pallas_src>
from functools import partial

import jax
import jax.numpy as jnp
from jax.experimental import pallas as pl
from jax.experimental.pallas import tpu as pltpu


def _interaction_kernel(p_ref, o_ref, wqs_ref, bqs_ref, wkv_ref, bkv_ref,
                        wo_ref, bo_ref, out_ref, *,
                        b_tile, thw, l, di, dout, scale, use_ln, eps):
    """One grid step = b_tile batch elements.

    p_ref:   [B, THW, Cp]   bf16     o_ref:   [B, L, Co]   bf16
    wqs_ref: [Cp, Di+Dout]  bf16     bqs_ref: [1, Di+Dout] f32   (fused query|shortcut)
    wkv_ref: [Co, 2*Di]     bf16     bkv_ref: [1, 2*Di]    f32   (fused key|value)
    wo_ref:  [Di, Dout]     bf16     bo_ref:  [1, Dout]    f32
    out_ref: [B, THW, Dout] f32
    """
    f32 = jnp.float32
    B, S, L, Di, Dout = b_tile, thw, l, di, dout

    p2 = p_ref[...].reshape(B * S, p_ref.shape[-1])      # [B*S, Cp]  bf16
    o2 = o_ref[...].reshape(B * L, o_ref.shape[-1])      # [B*L, Co]  bf16

    # Fused 1x1x1 conv projections (channel matmuls): bf16 in, f32 accumulate.
    qs = jnp.dot(p2, wqs_ref[...], preferred_element_type=f32) + bqs_ref[...]  # [B*S, Di+Dout]
    kv = jnp.dot(o2, wkv_ref[...], preferred_element_type=f32) + bkv_ref[...]  # [B*L, 2*Di]

    q = (qs[:, :Di] * scale).reshape(B, S, Di).astype(jnp.bfloat16)  # softmax scale folded into q
    sc = qs[:, Di:]                                                  # [B*S, Dout] shortcut conv
    k = kv[:, :Di].reshape(B, L, Di).astype(jnp.bfloat16)
    v = kv[:, Di:].reshape(B, L, Di).astype(jnp.bfloat16)

    # Attention: softmax over the "others * spatial" axis (PyTorch softmax dim=2).
    logits = jnp.einsum('bqd,bkd->bqk', q, k, preferred_element_type=f32)      # [B, S, L]
    logits = logits - jnp.max(logits, axis=-1, keepdims=True)
    e = jnp.exp(logits)
    attn = e * pl.reciprocal(jnp.sum(e, axis=-1, keepdims=True), approx=True)

    out = jnp.einsum('bqk,bkd->bqd', attn.astype(jnp.bfloat16), v,
                     preferred_element_type=f32)                               # [B, S, Di]

    if use_ln:
        # LayerNorm([Di, t, h, w], elementwise_affine=False): per sample over all S*Di elems.
        inv_n = 1.0 / (S * Di)
        mu = jnp.sum(jnp.sum(out, axis=2, keepdims=True), axis=1, keepdims=True) * inv_n
        c = out - mu
        var = jnp.sum(jnp.sum(c * c, axis=2, keepdims=True), axis=1, keepdims=True) * inv_n
        out = c * jax.lax.rsqrt(var + eps)

    out = jnp.maximum(out, 0.0)                                                # ReLU

    proj = jnp.dot(out.reshape(B * S, Di).astype(jnp.bfloat16), wo_ref[...],
                   preferred_element_type=f32) + bo_ref[...]                   # [B*S, Dout]
    out_ref[...] = (proj + sc).reshape(B, S, Dout)


def interaction_unit_forward(person, others, params, *, use_ln=True, b_tile=4):
    n, Cp, t, h, w = person.shape
    _, M, Co, to, ho, wo_ = others.shape
    THW = t * h * w
    Lspat = to * ho * wo_
    L = M * Lspat
    Di = params["wq"].shape[1]
    Dout = params["wo"].shape[1]
    scale = float(Di) ** (-0.5)

    # Channels-last flatten (other-major / spatial-minor for `others`), matching the
    # PyTorch reshape/transpose chain; cast to bf16 here so the kernel DMAs half the bytes.
    p_flat = jnp.transpose(person.reshape(n, Cp, THW), (0, 2, 1)).astype(jnp.bfloat16)
    o_flat = jnp.transpose(others.reshape(n, M, Co, Lspat),
                           (0, 1, 3, 2)).reshape(n, L, Co).astype(jnp.bfloat16)

    # Fused shared-input weights: q|shortcut (acts on person), k|v (acts on others).
    wqs = jnp.concatenate([params["wq"], params["wsc"]], axis=1).astype(jnp.bfloat16)
    bqs = jnp.concatenate([params["bq"], params["bsc"]], axis=1).astype(jnp.float32)
    wkv = jnp.concatenate([params["wk"], params["wv"]], axis=1).astype(jnp.bfloat16)
    bkv = jnp.concatenate([params["bk"], params["bv"]], axis=1).astype(jnp.float32)
    w_o = params["wo"].astype(jnp.bfloat16)
    b_o = params["bo"].astype(jnp.float32)

    # Batch tiling: several samples per grid step (amortize per-step overhead, fill MXU M dim).
    b_tile = max(1, min(b_tile, n))
    n_pad = ((n + b_tile - 1) // b_tile) * b_tile
    if n_pad != n:
        p_flat = jnp.pad(p_flat, ((0, n_pad - n), (0, 0), (0, 0)))
        o_flat = jnp.pad(o_flat, ((0, n_pad - n), (0, 0), (0, 0)))

    kernel = partial(_interaction_kernel, b_tile=b_tile, thw=THW, l=L, di=Di,
                     dout=Dout, scale=scale, use_ln=use_ln, eps=1e-5)

    out_flat = pl.pallas_call(
        kernel,
        out_shape=jax.ShapeDtypeStruct((n_pad, THW, Dout), jnp.float32),
        grid=(n_pad // b_tile,),
        in_specs=[
            pl.BlockSpec((b_tile, THW, Cp), lambda i: (i, 0, 0)),
            pl.BlockSpec((b_tile, L, Co), lambda i: (i, 0, 0)),
            # weights/biases: constant block index -> stay VMEM-resident across the grid
            pl.BlockSpec((Cp, Di + Dout), lambda i: (0, 0)),
            pl.BlockSpec((1, Di + Dout), lambda i: (0, 0)),
            pl.BlockSpec((Co, 2 * Di), lambda i: (0, 0)),
            pl.BlockSpec((1, 2 * Di), lambda i: (0, 0)),
            pl.BlockSpec((Di, Dout), lambda i: (0, 0)),
            pl.BlockSpec((1, Dout), lambda i: (0, 0)),
        ],
        out_specs=pl.BlockSpec((b_tile, THW, Dout), lambda i: (i, 0, 0)),
        compiler_params=pltpu.CompilerParams(
            # batch axis is independent -> shard across both TensorCores on v7x
            dimension_semantics=("parallel",),
            vmem_limit_bytes=32 * 1024 * 1024,
        ),
    )(p_flat, o_flat, wqs, bqs, wkv, bkv, w_o, b_o)

    out_flat = out_flat[:n]
    # back to NCTHW
    return jnp.transpose(out_flat, (0, 2, 1)).reshape(n, Dout, t, h, w)


def interaction_unit_reference(person, others, params, *, use_ln=True):
    """Pure-JAX f32 (HIGHEST precision) reference reproducing the PyTorch forward."""
    hi = jax.lax.Precision.HIGHEST
    n, Cp, t, h, w = person.shape
    _, M, Co, to, ho, wo_ = others.shape
    THW = t * h * w
    Lspat = to * ho * wo_
    L = M * Lspat
    Di = params["wq"].shape[1]
    Dout = params["wo"].shape[1]
    scale = float(Di) ** (-0.5)

    p_flat = jnp.transpose(person.reshape(n, Cp, THW), (0, 2, 1))
    o_flat = jnp.transpose(others.reshape(n, M, Co, Lspat), (0, 1, 3, 2)).reshape(n, L, Co)

    q = jnp.einsum('nsc,cd->nsd', p_flat, params["wq"], precision=hi) + params["bq"]
    k = jnp.einsum('nlc,cd->nld', o_flat, params["wk"], precision=hi) + params["bk"]
    v = jnp.einsum('nlc,cd->nld', o_flat, params["wv"], precision=hi) + params["bv"]

    logits = jnp.einsum('nqd,nld->nql', q, k, precision=hi) * scale
    attn = jax.nn.softmax(logits, axis=-1)
    out = jnp.einsum('nql,nld->nqd', attn, v, precision=hi)

    if use_ln:
        mu = jnp.mean(out, axis=(1, 2), keepdims=True)
        var = jnp.mean((out - mu) ** 2, axis=(1, 2), keepdims=True)
        out = (out - mu) / jnp.sqrt(var + 1e-5)
    out = jnp.maximum(out, 0.0)
    out = jnp.einsum('nqd,de->nqe', out, params["wo"], precision=hi) + params["bo"]
    sc = jnp.einsum('nsc,ce->nse', p_flat, params["wsc"], precision=hi) + params["bsc"]
    out = out + sc
    return jnp.transpose(out, (0, 2, 1)).reshape(n, Dout, t, h, w)


def make_params(key, dim_person, dim_other, dim_inner, dim_out, init_std=0.1):
    """Parameter init mirroring init_layer (normal(std) weights, zero bias).
    Weights are stored pre-transposed as [Cin, Cout] (1x1x1 conv == channel matmul)."""
    ks = jax.random.split(key, 5)
    return {
        "wq": init_std * jax.random.normal(ks[0], (dim_person, dim_inner), jnp.float32),
        "bq": jnp.zeros((1, dim_inner), jnp.float32),
        "wk": init_std * jax.random.normal(ks[1], (dim_other, dim_inner), jnp.float32),
        "bk": jnp.zeros((1, dim_inner), jnp.float32),
        "wv": init_std * jax.random.normal(ks[2], (dim_other, dim_inner), jnp.float32),
        "bv": jnp.zeros((1, dim_inner), jnp.float32),
        # USE_ZERO_INIT_CONV=False -> out conv also gets init_std
        "wo": init_std * jax.random.normal(ks[3], (dim_inner, dim_out), jnp.float32),
        "bo": jnp.zeros((1, dim_out), jnp.float32),
        # dim_person != dim_out -> shortcut conv exists
        "wsc": init_std * jax.random.normal(ks[4], (dim_person, dim_out), jnp.float32),
        "bsc": jnp.zeros((1, dim_out), jnp.float32),
    }


if __name__ == "__main__":
    # small shapes consistent with the module's forward
    n = 4
    dim_person, dim_other = 32, 32
    dim_inner, dim_out = 128, 128          # lane-dense channels; dim_person != dim_out -> shortcut conv
    max_others = 4
    t, h, w = 2, 4, 4                      # THW = 32, L = max_others*THW = 128

    key = jax.random.PRNGKey(0)
    kp, ko, kw = jax.random.split(key, 3)
    person = jax.random.normal(kp, (n, dim_person, t, h, w), jnp.float32)
    others = jax.random.normal(ko, (n, max_others, dim_other, t, h, w), jnp.float32)
    params = make_params(kw, dim_person, dim_other, dim_inner, dim_out, init_std=0.1)

    out = interaction_unit_forward(person, others, params, use_ln=True, b_tile=2)
    out = jax.block_until_ready(out)

    ref = interaction_unit_reference(person, others, params, use_ln=True)
    ref = jax.block_until_ready(ref)

    assert out.shape == (n, dim_out, t, h, w)
    # Kernel runs bf16-in / f32-accumulate on the MXU (plus approx reciprocal in softmax);
    # reference is f32 HIGHEST, so the tolerance reflects bf16 compute.
    err = float(jnp.max(jnp.abs(out - ref)))
    assert jnp.allclose(out, ref, atol=5e-2, rtol=5e-2), err

    print("KERNEL_OK")
</pallas_src>

<mosaic_0001>
module attributes {stable_mosaic.version = 11 : i64} {
  func.func @_interaction_kernel(%arg0: i32, %arg1: memref<2x32x32xbf16, #tpu.memory_space<vmem>>, %arg2: memref<2x128x32xbf16, #tpu.memory_space<vmem>>, %arg3: memref<32x256xbf16, #tpu.memory_space<vmem>>, %arg4: memref<1x256xf32, #tpu.memory_space<vmem>>, %arg5: memref<32x256xbf16, #tpu.memory_space<vmem>>, %arg6: memref<1x256xf32, #tpu.memory_space<vmem>>, %arg7: memref<128x128xbf16, #tpu.memory_space<vmem>>, %arg8: memref<1x128xf32, #tpu.memory_space<vmem>>, %arg9: memref<2x32x128xf32, #tpu.memory_space<vmem>>) attributes {dimension_semantics = [#tpu.dimension_semantics<parallel>], iteration_bounds = array<i64: 2>, scalar_prefetch = 0 : i64, scratch_operands = 0 : i64, tpu.core_type = #tpu.core_type<tc>, window_params = [{transform_indices = @transform_0, window_bounds = array<i64: 2, 32, 32>}, {transform_indices = @transform_1, window_bounds = array<i64: 2, 128, 32>}, {pipeline_mode = #tpu.pipeline_mode<synchronous>, transform_indices = @transform_2, window_bounds = array<i64: 32, 256>}, {pipeline_mode = #tpu.pipeline_mode<synchronous>, transform_indices = @transform_3, window_bounds = array<i64: 1, 256>}, {pipeline_mode = #tpu.pipeline_mode<synchronous>, transform_indices = @transform_4, window_bounds = array<i64: 32, 256>}, {pipeline_mode = #tpu.pipeline_mode<synchronous>, transform_indices = @transform_5, window_bounds = array<i64: 1, 256>}, {pipeline_mode = #tpu.pipeline_mode<synchronous>, transform_indices = @transform_6, window_bounds = array<i64: 128, 128>}, {pipeline_mode = #tpu.pipeline_mode<synchronous>, transform_indices = @transform_7, window_bounds = array<i64: 1, 128>}, {transform_indices = @transform_8, window_bounds = array<i64: 2, 32, 128>}]} {
    %c0 = arith.constant 0 : index
    %c0_0 = arith.constant 0 : index
    %c0_1 = arith.constant 0 : index
    %0 = vector.load %arg1[%c0, %c0_0, %c0_1] : memref<2x32x32xbf16, #tpu.memory_space<vmem>>, vector<2x32x32xbf16>
    %1 = vector.shape_cast %0 : vector<2x32x32xbf16> to vector<64x32xbf16>
    %c0_2 = arith.constant 0 : index
    %c0_3 = arith.constant 0 : index
    %c0_4 = arith.constant 0 : index
    %2 = vector.load %arg2[%c0_2, %c0_3, %c0_4] : memref<2x128x32xbf16, #tpu.memory_space<vmem>>, vector<2x128x32xbf16>
    %3 = vector.shape_cast %2 : vector<2x128x32xbf16> to vector<256x32xbf16>
    %c0_5 = arith.constant 0 : index
    %c0_6 = arith.constant 0 : index
    %4 = vector.load %arg3[%c0_5, %c0_6] : memref<32x256xbf16, #tpu.memory_space<vmem>>, vector<32x256xbf16>
    %cst = arith.constant dense<0.000000e+00> : vector<64x256xf32>
    %5 = tpu.matmul %1, %4, %cst {dimension_numbers = #tpu.dot_dimension_numbers<[1], [0], [0], [1], [0, 0, 1, 1], [], []>} : vector<64x32xbf16>, vector<32x256xbf16>, vector<64x256xf32> -> vector<64x256xf32>
    %c0_7 = arith.constant 0 : index
    %c0_8 = arith.constant 0 : index
    %6 = vector.load %arg4[%c0_7, %c0_8] : memref<1x256xf32, #tpu.memory_space<vmem>>, vector<1x256xf32>
    %7 = vector.broadcast %6 : vector<1x256xf32> to vector<64x256xf32>
    %8 = arith.addf %5, %7 : vector<64x256xf32>
    %c0_9 = arith.constant 0 : index
    %c0_10 = arith.constant 0 : index
    %9 = vector.load %arg5[%c0_9, %c0_10] : memref<32x256xbf16, #tpu.memory_space<vmem>>, vector<32x256xbf16>
    %cst_11 = arith.constant dense<0.000000e+00> : vector<256x256xf32>
    %10 = tpu.matmul %3, %9, %cst_11 {dimension_numbers = #tpu.dot_dimension_numbers<[1], [0], [0], [1], [0, 0, 1, 1], [], []>} : vector<256x32xbf16>, vector<32x256xbf16>, vector<256x256xf32> -> vector<256x256xf32>
    %c0_12 = arith.constant 0 : index
    %c0_13 = arith.constant 0 : index
    %11 = vector.load %arg6[%c0_12, %c0_13] : memref<1x256xf32, #tpu.memory_space<vmem>>, vector<1x256xf32>
    %12 = vector.broadcast %11 : vector<1x256xf32> to vector<256x256xf32>
    %13 = arith.addf %10, %12 : vector<256x256xf32>
    %14 = vector.extract_strided_slice %8 {offsets = [0, 0], sizes = [64, 128], strides = [1, 1]} : vector<64x256xf32> to vector<64x128xf32>
    %cst_14 = arith.constant 0.0883883461 : f32
    %15 = vector.broadcast %cst_14 : f32 to vector<64x128xf32>
    %16 = arith.mulf %14, %15 : vector<64x128xf32>
    %17 = vector.shape_cast %16 : vector<64x128xf32> to vector<2x32x128xf32>
    %18 = arith.truncf %17 : vector<2x32x128xf32> to vector<2x32x128xbf16>
    %19 = vector.extract_strided_slice %8 {offsets = [0, 128], sizes = [64, 128], strides = [1, 1]} : vector<64x256xf32> to vector<64x128xf32>
    %20 = vector.extract_strided_slice %13 {offsets = [0, 0], sizes = [256, 128], strides = [1, 1]} : vector<256x256xf32> to vector<256x128xf32>
    %21 = vector.shape_cast %20 : vector<256x128xf32> to vector<2x128x128xf32>
    %22 = arith.truncf %21 : vector<2x128x128xf32> to vector<2x128x128xbf16>
    %23 = vector.extract_strided_slice %13 {offsets = [0, 128], sizes = [256, 128], strides = [1, 1]} : vector<256x256xf32> to vector<256x128xf32>
    %24 = vector.shape_cast %23 : vector<256x128xf32> to vector<2x128x128xf32>
    %25 = arith.truncf %24 : vector<2x128x128xf32> to vector<2x128x128xbf16>
    "tpu.trace_start"() <{level = 10 : i32, message = "bqd,bkd->bqk"}> : () -> ()
    %cst_15 = arith.constant dense<0.000000e+00> : vector<2x32x128xf32>
    %26 = tpu.matmul %18, %22, %cst_15 {dimension_numbers = #tpu.dot_dimension_numbers<[2], [2], [1], [1], [0, 0, 0, 1, 1, 1], [0], [0]>} : vector<2x32x128xbf16>, vector<2x128x128xbf16>, vector<2x32x128xf32> -> vector<2x32x128xf32>
    "tpu.trace_stop"() : () -> ()
    %cst_16 = arith.constant dense<0xFF800000> : vector<2x32xf32>
    %27 = vector.multi_reduction <maximumf>, %26, %cst_16 [2] : vector<2x32x128xf32> to vector<2x32xf32>
    %28 = vector.shape_cast %27 : vector<2x32xf32> to vector<2x32x1xf32>
    %29 = vector.broadcast %28 : vector<2x32x1xf32> to vector<2x32x128xf32>
    %30 = arith.subf %26, %29 : vector<2x32x128xf32>
    %31 = math.exp %30 : vector<2x32x128xf32>
    %cst_17 = arith.constant dense<0.000000e+00> : vector<2x32xf32>
    %32 = vector.multi_reduction <add>, %31, %cst_17 [2] : vector<2x32x128xf32> to vector<2x32xf32>
    %33 = vector.shape_cast %32 : vector<2x32xf32> to vector<2x32x1xf32>
    %34 = tpu.reciprocal %33 {approx = true} : vector<2x32x1xf32> -> vector<2x32x1xf32>
    %35 = vector.broadcast %34 : vector<2x32x1xf32> to vector<2x32x128xf32>
    %36 = arith.mulf %31, %35 : vector<2x32x128xf32>
    %37 = arith.truncf %36 : vector<2x32x128xf32> to vector<2x32x128xbf16>
    "tpu.trace_start"() <{level = 10 : i32, message = "bqk,bkd->bqd"}> : () -> ()
    %cst_18 = arith.constant dense<0.000000e+00> : vector<2x32x128xf32>
    %38 = tpu.matmul %37, %25, %cst_18 {dimension_numbers = #tpu.dot_dimension_numbers<[2], [1], [1], [2], [0, 0, 0, 1, 1, 2], [0], [0]>} : vector<2x32x128xbf16>, vector<2x128x128xbf16>, vector<2x32x128xf32> -> vector<2x32x128xf32>
    "tpu.trace_stop"() : () -> ()
    %cst_19 = arith.constant dense<0.000000e+00> : vector<2x32xf32>
    %39 = vector.multi_reduction <add>, %38, %cst_19 [2] : vector<2x32x128xf32> to vector<2x32xf32>
    %40 = vector.shape_cast %39 : vector<2x32xf32> to vector<2x32x1xf32>
    %cst_20 = arith.constant dense<0.000000e+00> : vector<2x1xf32>
    %41 = vector.multi_reduction <add>, %40, %cst_20 [1] : vector<2x32x1xf32> to vector<2x1xf32>
    %42 = vector.shape_cast %41 : vector<2x1xf32> to vector<2x1x1xf32>
    %cst_21 = arith.constant 2.44140625E-4 : f32
    %43 = vector.broadcast %cst_21 : f32 to vector<2x1x1xf32>
    %44 = arith.mulf %42, %43 : vector<2x1x1xf32>
    %45 = vector.broadcast %44 : vector<2x1x1xf32> to vector<2x32x128xf32>
    %46 = arith.subf %38, %45 : vector<2x32x128xf32>
    %47 = arith.mulf %46, %46 : vector<2x32x128xf32>
    %cst_22 = arith.constant dense<0.000000e+00> : vector<2x32xf32>
    %48 = vector.multi_reduction <add>, %47, %cst_22 [2] : vector<2x32x128xf32> to vector<2x32xf32>
    %49 = vector.shape_cast %48 : vector<2x32xf32> to vector<2x32x1xf32>
    %cst_23 = arith.constant dense<0.000000e+00> : vector<2x1xf32>
    %50 = vector.multi_reduction <add>, %49, %cst_23 [1] : vector<2x32x1xf32> to vector<2x1xf32>
    %51 = vector.shape_cast %50 : vector<2x1xf32> to vector<2x1x1xf32>
    %cst_24 = arith.constant 2.44140625E-4 : f32
    %52 = vector.broadcast %cst_24 : f32 to vector<2x1x1xf32>
    %53 = arith.mulf %51, %52 : vector<2x1x1xf32>
    %cst_25 = arith.constant 9.99999974E-6 : f32
    %54 = vector.broadcast %cst_25 : f32 to vector<2x1x1xf32>
    %55 = arith.addf %53, %54 : vector<2x1x1xf32>
    %56 = math.rsqrt %55 : vector<2x1x1xf32>
    %57 = vector.broadcast %56 : vector<2x1x1xf32> to vector<2x32x128xf32>
    %58 = arith.mulf %46, %57 : vector<2x32x128xf32>
    %cst_26 = arith.constant 0.000000e+00 : f32
    %59 = vector.broadcast %cst_26 : f32 to vector<2x32x128xf32>
    %60 = arith.maximumf %58, %59 : vector<2x32x128xf32>
    %61 = vector.shape_cast %60 : vector<2x32x128xf32> to vector<64x128xf32>
    %62 = arith.truncf %61 : vector<64x128xf32> to vector<64x128xbf16>
    %c0_27 = arith.constant 0 : index
    %c0_28 = arith.constant 0 : index
    %63 = vector.load %arg7[%c0_27, %c0_28] : memref<128x128xbf16, #tpu.memory_space<vmem>>, vector<128x128xbf16>
    %cst_29 = arith.constant dense<0.000000e+00> : vector<64x128xf32>
    %64 = tpu.matmul %62, %63, %cst_29 {dimension_numbers = #tpu.dot_dimension_numbers<[1], [0], [0], [1], [0, 0, 1, 1], [], []>} : vector<64x128xbf16>, vector<128x128xbf16>, vector<64x128xf32> -> vector<64x128xf32>
    %c0_30 = arith.constant 0 : index
    %c0_31 = arith.constant 0 : index
    %65 = vector.load %arg8[%c0_30, %c0_31] : memref<1x128xf32, #tpu.memory_space<vmem>>, vector<1x128xf32>
    %66 = vector.broadcast %65 : vector<1x128xf32> to vector<64x128xf32>
    %67 = arith.addf %64, %66 : vector<64x128xf32>
    %68 = arith.addf %67, %19 : vector<64x128xf32>
    %69 = vector.shape_cast %68 : vector<64x128xf32> to vector<2x32x128xf32>
    %c0_32 = arith.constant 0 : index
    %c0_33 = arith.constant 0 : index
    %c0_34 = arith.constant 0 : index
    %70 = vector.load %arg9[%c0_32, %c0_33, %c0_34] : memref<2x32x128xf32, #tpu.memory_space<vmem>>, vector<2x32x128xf32>
    tpu.vector_store %arg9[%c0_32, %c0_33, %c0_34], %69 {strides = array<i32>} : memref<2x32x128xf32, #tpu.memory_space<vmem>>, vector<2x32x128xf32>,
    return
  }
  func.func @transform_0(%arg0: i32) -> (i32, i32, i32) {
    %c0_i32 = arith.constant 0 : i32
    %c0_i32_0 = arith.constant 0 : i32
    %c0_i32_1 = arith.constant 0 : i32
    return %arg0, %c0_i32, %c0_i32_0 : i32, i32, i32
  }
  func.func @transform_1(%arg0: i32) -> (i32, i32, i32) {
    %c0_i32 = arith.constant 0 : i32
    %c0_i32_0 = arith.constant 0 : i32
    %c0_i32_1 = arith.constant 0 : i32
    return %arg0, %c0_i32, %c0_i32_0 : i32, i32, i32
  }
  func.func @transform_2(%arg0: i32) -> (i32, i32) {
    %c0_i32 = arith.constant 0 : i32
    %c0_i32_0 = arith.constant 0 : i32
    %c0_i32_1 = arith.constant 0 : i32
    return %c0_i32, %c0_i32_0 : i32, i32
  }
  func.func @transform_3(%arg0: i32) -> (i32, i32) {
    %c0_i32 = arith.constant 0 : i32
    %c0_i32_0 = arith.constant 0 : i32
    %c0_i32_1 = arith.constant 0 : i32
    return %c0_i32, %c0_i32_0 : i32, i32
  }
  func.func @transform_4(%arg0: i32) -> (i32, i32) {
    %c0_i32 = arith.constant 0 : i32
    %c0_i32_0 = arith.constant 0 : i32
    %c0_i32_1 = arith.constant 0 : i32
    return %c0_i32, %c0_i32_0 : i32, i32
  }
  func.func @transform_5(%arg0: i32) -> (i32, i32) {
    %c0_i32 = arith.constant 0 : i32
    %c0_i32_0 = arith.constant 0 : i32
    %c0_i32_1 = arith.constant 0 : i32
    return %c0_i32, %c0_i32_0 : i32, i32
  }
  func.func @transform_6(%arg0: i32) -> (i32, i32) {
    %c0_i32 = arith.constant 0 : i32
    %c0_i32_0 = arith.constant 0 : i32
    %c0_i32_1 = arith.constant 0 : i32
    return %c0_i32, %c0_i32_0 : i32, i32
  }
  func.func @transform_7(%arg0: i32) -> (i32, i32) {
    %c0_i32 = arith.constant 0 : i32
    %c0_i32_0 = arith.constant 0 : i32
    %c0_i32_1 = arith.constant 0 : i32
    return %c0_i32, %c0_i32_0 : i32, i32
  }
  func.func @transform_8(%arg0: i32) -> (i32, i32, i32) {
    %c0_i32 = arith.constant 0 : i32
    %c0_i32_0 = arith.constant 0 : i32
    %c0_i32_1 = arith.constant 0 : i32
    return %arg0, %c0_i32, %c0_i32_0 : i32, i32, i32
  }
}

</mosaic_0001>

<llo_original>
// kernel: tpu_custom_call.1
$region0: #{tpu_custom_call.1}
  #allocation0 [shape = 'u32[]', space=smem, size = 0x4, offset = 0x4, fixed_abs, tag = 'smem constant byte address 0x4 - core index']
  #allocation1 [shape = 'u32[144,128]{1,0:T(1,128)}', space=vmem, size = 0x12000, scoped, tag = 'internal scratch']
  %s0 = inlined_call_operand.vmem [shape: bf16[4,32,32], index: 0, kind: input, shape index: {}]
  %s1 = inlined_call_operand.vmem [shape: bf16[4,128,32], index: 1, kind: input, shape index: {}]
  %s2 = inlined_call_operand.vmem [shape: bf16[32,256], index: 2, kind: input, shape index: {}]
  %s3 = inlined_call_operand.vmem [shape: f32[1,256], index: 3, kind: input, shape index: {}]
  %s4 = inlined_call_operand.vmem [shape: bf16[32,256], index: 4, kind: input, shape index: {}]
  %s5 = inlined_call_operand.vmem [shape: f32[1,256], index: 5, kind: input, shape index: {}]
  %s6 = inlined_call_operand.vmem [shape: bf16[128,128], index: 6, kind: input, shape index: {}]
  %s7 = inlined_call_operand.vmem [shape: f32[1,128], index: 7, kind: input, shape index: {}]
  %s8 = inlined_call_operand.hbm [shape: f32[4,32,128], index: 8, kind: output, shape index: {}]
  %s9 = sld [smem:[#allocation0]]
  $region65: #{tpu_custom_call.1} parent=0
    _
  %s11 = ssub.s32 1, %s9
  %s12 = scalar_select 0, %s11, %s9
  $region1: #{tpu_custom_call.1} parent=0
    #allocation2 [shape = 'u8[65536]{0}', space=vmem, size = 0x10000, scoped, tag = 'output window, operand 0']
    #allocation3 [shape = 's32[2]{0}', space=sflag, size = 0x8, scoped, tag = 'scoped memory for tpu_custom_call.1']
    %13 = vsyncpa [#allocation3], 0
    %s14 = scalar_lea.sflag [#allocation3], 1
    %15 = vsyncpa %s14, 0
    loop: start=0, step=1, limit=4
    $region2: #{tpu_custom_call.1} parent=1 // loop_pre_header
      _
    $region3: #{tpu_custom_call.1} parent=1 // loop_header
      %s17 = sphi 0, %s21
      %p18 = scmp.ge.s32.totalorder %s17, 4
      %s27 = sphi 0, %s29
      %s30 = sphi 0, %s27
      %s31 = sphi 0, %s30
      %s47 = sphi 0, %s31
      %s53 = sphi 0, %s55
      %s56 = sphi 0, %s53
      %s57 = sphi 0, %s56
      %s73 = sphi 0, %s57
      %s77 = sphi 0, %s77
      %s79 = sphi 0, %s77
      %s80 = sphi 0, %s79
      %s94 = sphi 0, %s80
      %s98 = sphi 0, %s98
      %s100 = sphi 0, %s98
      %s101 = sphi 0, %s100
      %s115 = sphi 0, %s101
      %s119 = sphi 0, %s119
      %s121 = sphi 0, %s119
      %s122 = sphi 0, %s121
      %s136 = sphi 0, %s122
      %s140 = sphi 0, %s140
      %s142 = sphi 0, %s140
      %s143 = sphi 0, %s142
      %s157 = sphi 0, %s143
      %s161 = sphi 0, %s161
      %s163 = sphi 0, %s161
      %s164 = sphi 0, %s163
      %s178 = sphi 0, %s164
      %s182 = sphi 0, %s182
      %s184 = sphi 0, %s182
      %s185 = sphi 0, %s184
      %s199 = sphi 0, %s185
      %s205 = sphi 0, %s207
      %s208 = sphi 0, %s205
      %s209 = sphi 0, %s208
      %s225 = sphi 0, %s209
    $region4: #{tpu_custom_call.1} parent=1 // loop_header_branch
      %20 = sbr.rel (%p18) target = $region8
    $region5: #{tpu_custom_call.1} parent=1 // loop_body
      %s22 = ssub.s32 %s17, 1
      %s23 = ssub.s32 %s17, 2
      %s24 = sadd.s32 %s17, 1
      %s25 = ssub.s32 %s17, %s24
      %p26 = scmp.eq.s32.totalorder %s25, 0
      %s28 = sadd.s32 %s27, 1
      %s29 = scalar_select %p26, %s27, %s28
      %p32 = pneg %p26
      %p33 = scmp.eq.s32.totalorder %s17, 1
      %p34 = por %p32, %p33
      %p35 = scmp.ne.s32.totalorder %s27, %s30
      %p36 = scmp.eq.s32.totalorder %s17, 0
      %p37 = por %p35, %p36
      %p38 = scmp.ne.s32.totalorder %s27, %s30
      %p39 = scmp.eq.s32.totalorder %s22, 1
      %p40 = por %p38, %p39
      %p41 = scmp.ne.s32.totalorder %s30, %s31
      %p42 = scmp.eq.s32.totalorder %s22, 0
      %p43 = por %p41, %p42
      %p44 = scmp.ne.s32.totalorder %s30, %s31
      %p45 = scmp.eq.s32.totalorder %s23, 1
      %p46 = por %p44, %p45
      %p48 = scmp.ne.s32.totalorder %s31, %s47
      %p49 = scmp.eq.s32.totalorder %s23, 0
      %p50 = por %p48, %p49
      %s51 = ssub.s32 %s17, %s24
      %p52 = scmp.eq.s32.totalorder %s51, 0
      %s54 = sadd.s32 %s53, 1
      %s55 = scalar_select %p52, %s53, %s54
      %p58 = pneg %p52
      %p59 = scmp.eq.s32.totalorder %s17, 1
      %p60 = por %p58, %p59
      %p61 = scmp.ne.s32.totalorder %s53, %s56
      %p62 = scmp.eq.s32.totalorder %s17, 0
      %p63 = por %p61, %p62
      %p64 = scmp.ne.s32.totalorder %s53, %s56
      %p65 = scmp.eq.s32.totalorder %s22, 1
      %p66 = por %p64, %p65
      %p67 = scmp.ne.s32.totalorder %s56, %s57
      %p68 = scmp.eq.s32.totalorder %s22, 0
      %p69 = por %p67, %p68
      %p70 = scmp.ne.s32.totalorder %s56, %s57
      %p71 = scmp.eq.s32.totalorder %s23, 1
      %p72 = por %p70, %p71
      %p74 = scmp.ne.s32.totalorder %s57, %s73
      %p75 = scmp.eq.s32.totalorder %s23, 0
      %p76 = por %p74, %p75
      %s78 = sadd.s32 %s77, 1
      %p81 = scmp.eq.s32.totalorder %s17, 1
      %p82 = scmp.ne.s32.totalorder %s77, %s79
      %p83 = scmp.eq.s32.totalorder %s17, 0
      %p84 = por %p82, %p83
      %p85 = scmp.ne.s32.totalorder %s77, %s79
      %p86 = scmp.eq.s32.totalorder %s22, 1
      %p87 = por %p85, %p86
      %p88 = scmp.ne.s32.totalorder %s79, %s80
      %p89 = scmp.eq.s32.totalorder %s22, 0
      %p90 = por %p88, %p89
      %p91 = scmp.ne.s32.totalorder %s79, %s80
      %p92 = scmp.eq.s32.totalorder %s23, 1
      %p93 = por %p91, %p92
      %p95 = scmp.ne.s32.totalorder %s80, %s94
      %p96 = scmp.eq.s32.totalorder %s23, 0
      %p97 = por %p95, %p96
      %s99 = sadd.s32 %s98, 1
      %p102 = scmp.eq.s32.totalorder %s17, 1
      %p103 = scmp.ne.s32.totalorder %s98, %s100
      %p104 = scmp.eq.s32.totalorder %s17, 0
      %p105 = por %p103, %p104
      %p106 = scmp.ne.s32.totalorder %s98, %s100
      %p107 = scmp.eq.s32.totalorder %s22, 1
      %p108 = por %p106, %p107
      %p109 = scmp.ne.s32.totalorder %s100, %s101
      %p110 = scmp.eq.s32.totalorder %s22, 0
      %p111 = por %p109, %p110
      %p112 = scmp.ne.s32.totalorder %s100, %s101
      %p113 = scmp.eq.s32.totalorder %s23, 1
      %p114 = por %p112, %p113
      %p116 = scmp.ne.s32.totalorder %s101, %s115
      %p117 = scmp.eq.s32.totalorder %s23, 0
      %p118 = por %p116, %p117
      %s120 = sadd.s32 %s119, 1
      %p123 = scmp.eq.s32.totalorder %s17, 1
      %p124 = scmp.ne.s32.totalorder %s119, %s121
      %p125 = scmp.eq.s32.totalorder %s17, 0
      %p126 = por %p124, %p125
      %p127 = scmp.ne.s32.totalorder %s119, %s121
      %p128 = scmp.eq.s32.totalorder %s22, 1
      %p129 = por %p127, %p128
      %p130 = scmp.ne.s32.totalorder %s121, %s122
      %p131 = scmp.eq.s32.totalorder %s22, 0
      %p132 = por %p130, %p131
      %p133 = scmp.ne.s32.totalorder %s121, %s122
      %p134 = scmp.eq.s32.totalorder %s23, 1
      %p135 = por %p133, %p134
      %p137 = scmp.ne.s32.totalorder %s122, %s136
      %p138 = scmp.eq.s32.totalorder %s23, 0
      %p139 = por %p137, %p138
      %s141 = sadd.s32 %s140, 1
      %p144 = scmp.eq.s32.totalorder %s17, 1
      %p145 = scmp.ne.s32.totalorder %s140, %s142
      %p146 = scmp.eq.s32.totalorder %s17, 0
      %p147 = por %p145, %p146
      %p148 = scmp.ne.s32.totalorder %s140, %s142
      %p149 = scmp.eq.s32.totalorder %s22, 1
      %p150 = por %p148, %p149
      %p151 = scmp.ne.s32.totalorder %s142, %s143
      %p152 = scmp.eq.s32.totalorder %s22, 0
      %p153 = por %p151, %p152
      %p154 = scmp.ne.s32.totalorder %s142, %s143
      %p155 = scmp.eq.s32.totalorder %s23, 1
      %p156 = por %p154, %p155
      %p158 = scmp.ne.s32.totalorder %s143, %s157
      %p159 = scmp.eq.s32.totalorder %s23, 0
      %p160 = por %p158, %p159
      %s162 = sadd.s32 %s161, 1
      %p165 = scmp.eq.s32.totalorder %s17, 1
      %p166 = scmp.ne.s32.totalorder %s161, %s163
      %p167 = scmp.eq.s32.totalorder %s17, 0
      %p168 = por %p166, %p167
      %p169 = scmp.ne.s32.totalorder %s161, %s163
      %p170 = scmp.eq.s32.totalorder %s22, 1
      %p171 = por %p169, %p170
      %p172 = scmp.ne.s32.totalorder %s163, %s164
      %p173 = scmp.eq.s32.totalorder %s22, 0
      %p174 = por %p172, %p173
      %p175 = scmp.ne.s32.totalorder %s163, %s164
      %p176 = scmp.eq.s32.totalorder %s23, 1
      %p177 = por %p175, %p176
      %p179 = scmp.ne.s32.totalorder %s164, %s178
      %p180 = scmp.eq.s32.totalorder %s23, 0
      %p181 = por %p179, %p180
      %s183 = sadd.s32 %s182, 1
      %p186 = scmp.eq.s32.totalorder %s17, 1
      %p187 = scmp.ne.s32.totalorder %s182, %s184
      %p188 = scmp.eq.s32.totalorder %s17, 0
      %p189 = por %p187, %p188
      %p190 = scmp.ne.s32.totalorder %s182, %s184
      %p191 = scmp.eq.s32.totalorder %s22, 1
      %p192 = por %p190, %p191
      %p193 = scmp.ne.s32.totalorder %s184, %s185
      %p194 = scmp.eq.s32.totalorder %s22, 0
      %p195 = por %p193, %p194
      %p196 = scmp.ne.s32.totalorder %s184, %s185
      %p197 = scmp.eq.s32.totalorder %s23, 1
      %p198 = por %p196, %p197
      %p200 = scmp.ne.s32.totalorder %s185, %s199
      %p201 = scmp.eq.s32.totalorder %s23, 0
      %p202 = por %p200, %p201
      %s203 = ssub.s32 %s17, %s24
      %p204 = scmp.eq.s32.totalorder %s203, 0
      %s206 = sadd.s32 %s205, 1
      %s207 = scalar_select %p204, %s205, %s206
      %p210 = pneg %p204
      %p211 = scmp.eq.s32.totalorder %s17, 1
      %p212 = por %p210, %p211
      %p213 = scmp.ne.s32.totalorder %s205, %s208
      %p214 = scmp.eq.s32.totalorder %s17, 0
      %p215 = por %p213, %p214
      %p216 = scmp.ne.s32.totalorder %s205, %s208
      %p217 = scmp.eq.s32.totalorder %s22, 1
      %p218 = por %p216, %p217
      %p219 = scmp.ne.s32.totalorder %s208, %s209
      %p220 = scmp.eq.s32.totalorder %s22, 0
      %p221 = por %p219, %p220
      %p222 = scmp.ne.s32.totalorder %s208, %s209
      %p223 = scmp.eq.s32.totalorder %s23, 1
      %p224 = por %p222, %p223
      %p226 = scmp.ne.s32.totalorder %s209, %s225
      %p227 = scmp.eq.s32.totalorder %s23, 0
      %p228 = por %p226, %p227
      %p229 = scmp.le.s32.totalorder 1, %s17
      %p230 = scmp.lt.s32.totalorder %s17, 3
      %p231 = pnand %p229, %p230
      %p232 = pneg %p231
      // Predicated region
      $region9: #{tpu_custom_call.1} parent=5 // pred_check
        _
      $region10: #{tpu_custom_call.1} parent=5 // pred_check_branch
        %234 = sbr.rel (%p231) target = $region12
      $region11: #{tpu_custom_call.1} parent=5 // pred_region
        %s235 = ssub.s32 %s17, 1
        // Predicated region
        $region13: #{tpu_custom_call.1} parent=11 // pred_check
          %p236 = pneg %p90
        $region14: #{tpu_custom_call.1} parent=11 // pred_check_branch
          %238 = sbr.rel (%p236) target = $region16
        $region15: #{tpu_custom_call.1} parent=11 // pred_region
          _
        $region16: #{tpu_custom_call.1} parent=11 // pred_fallthru
          _
        // Predicated region
        $region17: #{tpu_custom_call.1} parent=11 // pred_check
          %p239 = pneg %p111
        $region18: #{tpu_custom_call.1} parent=11 // pred_check_branch
          %241 = sbr.rel (%p239) target = $region20
        $region19: #{tpu_custom_call.1} parent=11 // pred_region
          _
        $region20: #{tpu_custom_call.1} parent=11 // pred_fallthru
          _
        // Predicated region
        $region21: #{tpu_custom_call.1} parent=11 // pred_check
          %p242 = pneg %p132
        $region22: #{tpu_custom_call.1} parent=11 // pred_check_branch
          %244 = sbr.rel (%p242) target = $region24
        $region23: #{tpu_custom_call.1} parent=11 // pred_region
          _
        $region24: #{tpu_custom_call.1} parent=11 // pred_fallthru
          _
        // Predicated region
        $region25: #{tpu_custom_call.1} parent=11 // pred_check
          %p245 = pneg %p153
        $region26: #{tpu_custom_call.1} parent=11 // pred_check_branch
          %247 = sbr.rel (%p245) target = $region28
        $region27: #{tpu_custom_call.1} parent=11 // pred_region
          _
        $region28: #{tpu_custom_call.1} parent=11 // pred_fallthru
          _
        // Predicated region
        $region29: #{tpu_custom_call.1} parent=11 // pred_check
          %p248 = pneg %p174
        $region30: #{tpu_custom_call.1} parent=11 // pred_check_branch
          %250 = sbr.rel (%p248) target = $region32
        $region31: #{tpu_custom_call.1} parent=11 // pred_region
          _
        $region32: #{tpu_custom_call.1} parent=11 // pred_fallthru
          _
        // Predicated region
        $region33: #{tpu_custom_call.1} parent=11 // pred_check
          %p251 = pneg %p195
        $region34: #{tpu_custom_call.1} parent=11 // pred_check_branch
          %253 = sbr.rel (%p251) target = $region36
        $region35: #{tpu_custom_call.1} parent=11 // pred_region
          _
        $region36: #{tpu_custom_call.1} parent=11 // pred_fallthru
          _
      $region12: #{tpu_custom_call.1} parent=5 // pred_fallthru
        _
      %p254 = scmp.lt.s32.totalorder %s17, 2
      // Predicated region
      $region37: #{tpu_custom_call.1} parent=5 // pred_check
        %p255 = pneg %p254
      $region38: #{tpu_custom_call.1} parent=5 // pred_check_branch
        %257 = sbr.rel (%p255) target = $region40
      $region39: #{tpu_custom_call.1} parent=5 // pred_region
        // Predicated region
        $region41: #{tpu_custom_call.1} parent=39 // pred_check
          %p258 = pneg %p37
        $region42: #{tpu_custom_call.1} parent=39 // pred_check_branch
          %260 = sbr.rel (%p258) target = $region44
        $region43: #{tpu_custom_call.1} parent=39 // pred_region
          %s261 = smul.u32 2, %s17
          %p262 = scmp.lt.s32.totalorder %s261, 3
          %s263 = scalar_select %p262, %s261, 3
          %s264 = smul.addr %s263, 4
          %s265 = smul.addr %s264, 4
          %s266 = scalar_lea.vmem %s0, %s265
          %s267 = smul.u32 2, %s17
        $region44: #{tpu_custom_call.1} parent=39 // pred_fallthru
          _
        // Predicated region
        $region45: #{tpu_custom_call.1} parent=39 // pred_check
          %p268 = pneg %p63
        $region46: #{tpu_custom_call.1} parent=39 // pred_check_branch
          %270 = sbr.rel (%p268) target = $region48
        $region47: #{tpu_custom_call.1} parent=39 // pred_region
          %s271 = smul.u32 2, %s17
          %p272 = scmp.lt.s32.totalorder %s271, 3
          %s273 = scalar_select %p272, %s271, 3
          %s274 = smul.addr %s273, 16
          %s275 = smul.addr %s274, 4
          %s276 = scalar_lea.vmem %s1, %s275
          %s277 = smul.u32 2, %s17
        $region48: #{tpu_custom_call.1} parent=39 // pred_fallthru
          _
      $region40: #{tpu_custom_call.1} parent=5 // pred_fallthru
        _
      %p278 = scmp.le.s32.totalorder 1, %s17
      %p279 = scmp.lt.s32.totalorder %s17, 3
      %p280 = pnand %p278, %p279
      %p281 = pneg %p280
      // Predicated region
      $region49: #{tpu_custom_call.1} parent=5 // pred_check
        _
      $region50: #{tpu_custom_call.1} parent=5 // pred_check_branch
        %283 = sbr.rel (%p280) target = $region52
      $region51: #{tpu_custom_call.1} parent=5 // pred_region
        %s284 = ssub.s32 %s17, 1
        %s285 = smul.u32 2, %s22
        %p286 = scmp.lt.s32.totalorder %s285, 3
        %s287 = scalar_select %p286, %s285, 3
        %s288 = smul.addr %s287, 4
        %s289 = smul.addr %s288, 4
        %s290 = scalar_lea.vmem %s0, %s289
        %p291 = pneg %p43
        %p292 = pneg %p40
        %s293 = smul.u32 2, %s22
        %p294 = scmp.lt.s32.totalorder %s293, 3
        %s295 = scalar_select %p294, %s293, 3
        %s296 = smul.addr %s295, 16
        %s297 = smul.addr %s296, 4
        %s298 = scalar_lea.vmem %s1, %s297
        %p299 = pneg %p69
        %p300 = pneg %p66
        %p301 = pneg %p90
        %p302 = pneg %p87
        %p303 = pneg %p111
        %p304 = pneg %p108
        %p305 = pneg %p132
        %p306 = pneg %p129
        %p307 = pneg %p153
        %p308 = pneg %p150
        %p309 = pneg %p174
        %p310 = pneg %p171
        %p311 = pneg %p195
        %p312 = pneg %p192
        %p313 = pneg %p221
        %p314 = pneg %p218
        %s315 = sand.u32 %s208, 1
        %s316 = scalar_lea.sflag [#allocation3], %s315
        %s317 = sand.u32 %s208, 1
        %s318 = smul.addr %s317, 64
        %s319 = scalar_lea.vmem [#allocation2], %s318
        %s320 = smul.u32 2, %s22
        %p321 = scmp.lt.s32.totalorder %s320, 3
        %s322 = scalar_select %p321, %s320, 3
        %s323 = smul.addr %s322, 4
        %s324 = smul.addr %s323, 4
        %s325 = scalar_lea.vmem %s0, %s324
        %s326 = smul.u32 2, %s22
        %s327 = smul.u32 2, %s22
        %p328 = scmp.lt.s32.totalorder %s327, 3
        %s329 = scalar_select %p328, %s327, 3
        %s330 = smul.addr %s329, 16
        %s331 = smul.addr %s330, 4
        %s332 = scalar_lea.vmem %s1, %s331
        %s333 = smul.u32 2, %s22
        %s334 = smul.u32 2, %s22
        %v336 = vld [vmem:[%s325] sm:$0xf]
        %v337 = vld [vmem:[%s325 + $0x4] sm:$0xf]
        %v338 = vld [vmem:[%s325 + $0x8] sm:$0xf]
        %v339 = vld [vmem:[%s325 + $0xc] sm:$0xf]
        %v340 = vld [vmem:[%s325 + $0x10] sm:$0xf]
        %v341 = vld [vmem:[%s325 + $0x14] sm:$0xf]
        %v342 = vld [vmem:[%s325 + $0x18] sm:$0xf]
        %v343 = vld [vmem:[%s325 + $0x1c] sm:$0xf]
        %v344 = vld [vmem:[%s332] sm:$0xf]
        %v345 = vld [vmem:[%s332 + $0x4] sm:$0xf]
        %v346 = vld [vmem:[%s332 + $0x8] sm:$0xf]
        %v347 = vld [vmem:[%s332 + $0xc] sm:$0xf]
        %v348 = vld [vmem:[%s332 + $0x10] sm:$0xf]
        %v349 = vld [vmem:[%s332 + $0x14] sm:$0xf]
        %v350 = vld [vmem:[%s332 + $0x18] sm:$0xf]
        %v351 = vld [vmem:[%s332 + $0x1c] sm:$0xf]
        %v352 = vld [vmem:[%s332 + $0x20] sm:$0xf]
        %v353 = vld [vmem:[%s332 + $0x24] sm:$0xf]
        %v354 = vld [vmem:[%s332 + $0x28] sm:$0xf]
        %v355 = vld [vmem:[%s332 + $0x2c] sm:$0xf]
        %v356 = vld [vmem:[%s332 + $0x30] sm:$0xf]
        %v357 = vld [vmem:[%s332 + $0x34] sm:$0xf]
        %v358 = vld [vmem:[%s332 + $0x38] sm:$0xf]
        %v359 = vld [vmem:[%s332 + $0x3c] sm:$0xf]
        %v360 = vld [vmem:[%s332 + $0x40] sm:$0xf]
        %v361 = vld [vmem:[%s332 + $0x44] sm:$0xf]
        %v362 = vld [vmem:[%s332 + $0x48] sm:$0xf]
        %v363 = vld [vmem:[%s332 + $0x4c] sm:$0xf]
        %v364 = vld [vmem:[%s332 + $0x50] sm:$0xf]
        %v365 = vld [vmem:[%s332 + $0x54] sm:$0xf]
        %v366 = vld [vmem:[%s332 + $0x58] sm:$0xf]
        %v367 = vld [vmem:[%s332 + $0x5c] sm:$0xf]
        %v368 = vld [vmem:[%s332 + $0x60] sm:$0xf]
        %v369 = vld [vmem:[%s332 + $0x64] sm:$0xf]
        %v370 = vld [vmem:[%s332 + $0x68] sm:$0xf]
        %v371 = vld [vmem:[%s332 + $0x6c] sm:$0xf]
        %v372 = vld [vmem:[%s332 + $0x70] sm:$0xf]
        %v373 = vld [vmem:[%s332 + $0x74] sm:$0xf]
        %v374 = vld [vmem:[%s332 + $0x78] sm:$0xf]
        %v375 = vld [vmem:[%s332 + $0x7c] sm:$0xf]
        %v376 = vld [vmem:[%s2] sm:$0xff]
        %v377 = vld [vmem:[%s2 + $0x8] sm:$0xff]
        %v378 = vld [vmem:[%s2 + $0x10] sm:$0xff]
        %v379 = vld [vmem:[%s2 + $0x18] sm:$0xff]
        %v380 = vld [vmem:[%s3] sm:$0x3]
        %v382 = vlaneseq
        %v383 = vshrl.u32 %v382, 7
        %v384 = vsub.s32 0, %v383
        %v385 = vrot.slane %v380, %v384
        %v386 = vlaneseq
        %v387 = vshrl.u32 %v386, 7
        %v388 = vsub.s32 1, %v387
        %v389 = vrot.slane %v380, %v388
        %v400 = vunpack.c.l.b16 %v336
        %v401 = vunpack.c.l.b16 %v337
        %v402 = vunpack.c.l.b16 %v338
        %v403 = vunpack.c.l.b16 %v339
        %v404 = vunpack.c.l.b16 %v340
        %v405 = vunpack.c.l.b16 %v341
        %v406 = vunpack.c.l.b16 %v342
        %v407 = vunpack.c.l.b16 %v343
        %v408 = vpack.c.b16 %v401, %v400
        %v409 = vpack.c.b16 %v403, %v402
        %v410 = vpack.c.b16 %v405, %v404
        %v411 = vpack.c.b16 %v407, %v406
        %v416 = vunpack.c.l.b16 %v376
        %v417 = vunpack.c.h.b16 %v376
        %v418 = vunpack.c.l.b16 %v377
        %v419 = vunpack.c.h.b16 %v377
        %v420 = vunpack.c.l.b16 %v378
        %v421 = vunpack.c.h.b16 %v378
        %v422 = vunpack.c.l.b16 %v379
        %v423 = vunpack.c.h.b16 %v379
        %v424 = vpack.c.b16 %v418, %v416
        %v425 = vpack.c.b16 %v419, %v417
        %v426 = vpack.c.b16 %v422, %v420
        %v427 = vpack.c.b16 %v423, %v421
        %vm432 = vcmask 261120
        %v434 = vsel %vm432, %v408, 0
        %v437 = vsel %vm432, %v409, 0
        %v440 = vsel %vm432, %v410, 0
        %v443 = vsel %vm432, %v411, 0
        %445 = vmatprep.subr.bf16.mxu0 %v425
        %446 = vmatpush1.bf16.msra.mxu0 %v424
        %447 = vmatprep.subr.bf16.mxu0 %v427
        %448 = vmatpush1.bf16.msra.mxu0 %v426
        %449 = vmatprep.subr.bf16.mxu0 0
        %450 = vmatpush1.bf16.msra.mxu0 0
        %451 = vmatprep.subr.bf16.mxu0 0
        %452 = vmatpush1.bf16.msra.mxu0 0
        %453 = vmatprep.subr.bf16.mxu0 0
        %454 = vmatpush1.bf16.msra.mxu0 0
        %455 = vmatprep.subr.bf16.mxu0 0
        %456 = vmatpush1.bf16.msra.mxu0 0
        %457 = vmatprep.subr.bf16.mxu0 0
        %458 = vmatpush1.bf16.msra.mxu0 0
        %459 = vmatprep.subr.bf16.mxu0 0
        %460 = vmatpush1.bf16.msra.mxu0 0
        %461 = vmatprep.subr.bf16.mxu0 0
        %462 = vmatpush1.bf16.msra.mxu0 0
        %463 = vmatprep.subr.bf16.mxu0 0
        %464 = vmatpush1.bf16.msra.mxu0 0
        %465 = vmatprep.subr.bf16.mxu0 0
        %466 = vmatpush1.bf16.msra.mxu0 0
        %467 = vmatprep.subr.bf16.mxu0 0
        %468 = vmatpush1.bf16.msra.mxu0 0
        %469 = vmatprep.subr.bf16.mxu0 0
        %470 = vmatpush1.bf16.msra.mxu0 0
        %471 = vmatprep.subr.bf16.mxu0 0
        %472 = vmatpush1.bf16.msra.mxu0 0
        %473 = vmatprep.subr.bf16.mxu0 0
        %474 = vmatpush1.bf16.msra.mxu0 0
        %475 = vmatprep.subr.bf16.mxu0 0
        %476 = vmatpush1.bf16.msra.mxu0 0
        %477 = vmatprep.mubr.bf16.mxu0 0
        %478 = vmatmul.mubr.bf16.gmra.mrb[0].mxu0 %v434
        %v479 = vpop.f32.mrb[0].mxu0
        %v480 = vadd.f32 %v385, %v479
        %v481 = vpop.f32.mrb[0].mxu0
        %v482 = vadd.f32 %v389, %v481
        %v483 = vpop.f32.mrb[0].mxu0
        %v484 = vadd.f32 %v385, %v483
        %v485 = vpop.f32.mrb[0].mxu0
        %v486 = vadd.f32 %v389, %v485
        %487 = vmatprep.mubr.bf16.mxu0 0
        %488 = vmatmul.mubr.bf16.gmra.mrb[0].mxu0 %v437
        %v489 = vpop.f32.mrb[0].mxu0
        %v490 = vadd.f32 %v385, %v489
        %v491 = vpop.f32.mrb[0].mxu0
        %v492 = vadd.f32 %v389, %v491
        %v493 = vpop.f32.mrb[0].mxu0
        %v494 = vadd.f32 %v385, %v493
        %v495 = vpop.f32.mrb[0].mxu0
        %v496 = vadd.f32 %v389, %v495
        %497 = vmatprep.mubr.bf16.mxu0 0
        %498 = vmatmul.mubr.bf16.gmra.mrb[0].mxu0 %v440
        %v499 = vpop.f32.mrb[0].mxu0
        %v500 = vadd.f32 %v385, %v499
        %v501 = vpop.f32.mrb[0].mxu0
        %v502 = vadd.f32 %v389, %v501
        %v503 = vpop.f32.mrb[0].mxu0
        %v504 = vadd.f32 %v385, %v503
        %v505 = vpop.f32.mrb[0].mxu0
        %v506 = vadd.f32 %v389, %v505
        %507 = vmatprep.mubr.bf16.mxu0 0
        %508 = vmatmul.mubr.bf16.gmra.mrb[0].mxu0 %v443
        %v509 = vpop.f32.mrb[0].mxu0
        %v510 = vadd.f32 %v385, %v509
        %v511 = vpop.f32.mrb[0].mxu0
        %v512 = vadd.f32 %v389, %v511
        %v513 = vpop.f32.mrb[0].mxu0
        %v514 = vadd.f32 %v385, %v513
        %v515 = vpop.f32.mrb[0].mxu0
        %v516 = vadd.f32 %v389, %v515
        %517 = vdwg.mxu0
        %v518 = vld [vmem:[%s4] sm:$0xff]
        %v519 = vld [vmem:[%s4 + $0x8] sm:$0xff]
        %v520 = vld [vmem:[%s4 + $0x10] sm:$0xff]
        %v521 = vld [vmem:[%s4 + $0x18] sm:$0xff]
        %v522 = vld [vmem:[%s5] sm:$0x3]
        %v524 = vlaneseq
        %v525 = vshrl.u32 %v524, 7
        %v526 = vsub.s32 0, %v525
        %v527 = vrot.slane %v522, %v526
        %v528 = vlaneseq
        %v529 = vshrl.u32 %v528, 7
        %v530 = vsub.s32 1, %v529
        %v531 = vrot.slane %v522, %v530
        %v566 = vunpack.c.l.b16 %v344
        %v567 = vunpack.c.l.b16 %v345
        %v568 = vunpack.c.l.b16 %v346
        %v569 = vunpack.c.l.b16 %v347
        %v570 = vunpack.c.l.b16 %v348
        %v571 = vunpack.c.l.b16 %v349
        %v572 = vunpack.c.l.b16 %v350
        %v573 = vunpack.c.l.b16 %v351
        %v574 = vunpack.c.l.b16 %v352
        %v575 = vunpack.c.l.b16 %v353
        %v576 = vunpack.c.l.b16 %v354
        %v577 = vunpack.c.l.b16 %v355
        %v578 = vunpack.c.l.b16 %v356
        %v579 = vunpack.c.l.b16 %v357
        %v580 = vunpack.c.l.b16 %v358
        %v581 = vunpack.c.l.b16 %v359
        %v582 = vunpack.c.l.b16 %v360
        %v583 = vunpack.c.l.b16 %v361
        %v584 = vunpack.c.l.b16 %v362
        %v585 = vunpack.c.l.b16 %v363
        %v586 = vunpack.c.l.b16 %v364
        %v587 = vunpack.c.l.b16 %v365
        %v588 = vunpack.c.l.b16 %v366
        %v589 = vunpack.c.l.b16 %v367
        %v590 = vunpack.c.l.b16 %v368
        %v591 = vunpack.c.l.b16 %v369
        %v592 = vunpack.c.l.b16 %v370
        %v593 = vunpack.c.l.b16 %v371
        %v594 = vunpack.c.l.b16 %v372
        %v595 = vunpack.c.l.b16 %v373
        %v596 = vunpack.c.l.b16 %v374
        %v597 = vunpack.c.l.b16 %v375
        %v598 = vpack.c.b16 %v567, %v566
        %v599 = vpack.c.b16 %v569, %v568
        %v600 = vpack.c.b16 %v571, %v570
        %v601 = vpack.c.b16 %v573, %v572
        %v602 = vpack.c.b16 %v575, %v574
        %v603 = vpack.c.b16 %v577, %v576
        %v604 = vpack.c.b16 %v579, %v578
        %v605 = vpack.c.b16 %v581, %v580
        %v606 = vpack.c.b16 %v583, %v582
        %v607 = vpack.c.b16 %v585, %v584
        %v608 = vpack.c.b16 %v587, %v586
        %v609 = vpack.c.b16 %v589, %v588
        %v610 = vpack.c.b16 %v591, %v590
        %v611 = vpack.c.b16 %v593, %v592
        %v612 = vpack.c.b16 %v595, %v594
        %v613 = vpack.c.b16 %v597, %v596
        %v618 = vunpack.c.l.b16 %v518
        %v619 = vunpack.c.h.b16 %v518
        %v620 = vunpack.c.l.b16 %v519
        %v621 = vunpack.c.h.b16 %v519
        %v622 = vunpack.c.l.b16 %v520
        %v623 = vunpack.c.h.b16 %v520
        %v624 = vunpack.c.l.b16 %v521
        %v625 = vunpack.c.h.b16 %v521
        %v626 = vpack.c.b16 %v620, %v618
        %v627 = vpack.c.b16 %v621, %v619
        %v628 = vpack.c.b16 %v624, %v622
        %v629 = vpack.c.b16 %v625, %v623
        %v635 = vsel %vm432, %v598, 0
        %v638 = vsel %vm432, %v599, 0
        %v641 = vsel %vm432, %v600, 0
        %v644 = vsel %vm432, %v601, 0
        %v647 = vsel %vm432, %v602, 0
        %v650 = vsel %vm432, %v603, 0
        %v653 = vsel %vm432, %v604, 0
        %v656 = vsel %vm432, %v605, 0
        %v659 = vsel %vm432, %v606, 0
        %v662 = vsel %vm432, %v607, 0
        %v665 = vsel %vm432, %v608, 0
        %v668 = vsel %vm432, %v609, 0
        %v671 = vsel %vm432, %v610, 0
        %v674 = vsel %vm432, %v611, 0
        %v677 = vsel %vm432, %v612, 0
        %v680 = vsel %vm432, %v613, 0
        %682 = vmatprep.subr.bf16.mxu0 %v627
        %683 = vmatpush1.bf16.msra.mxu0 %v626
        %684 = vmatprep.subr.bf16.mxu0 %v629
        %685 = vmatpush1.bf16.msra.mxu0 %v628
        %686 = vmatprep.subr.bf16.mxu0 0
        %687 = vmatpush1.bf16.msra.mxu0 0
        %688 = vmatprep.subr.bf16.mxu0 0
        %689 = vmatpush1.bf16.msra.mxu0 0
        %690 = vmatprep.subr.bf16.mxu0 0
        %691 = vmatpush1.bf16.msra.mxu0 0
        %692 = vmatprep.subr.bf16.mxu0 0
        %693 = vmatpush1.bf16.msra.mxu0 0
        %694 = vmatprep.subr.bf16.mxu0 0
        %695 = vmatpush1.bf16.msra.mxu0 0
        %696 = vmatprep.subr.bf16.mxu0 0
        %697 = vmatpush1.bf16.msra.mxu0 0
        %698 = vmatprep.subr.bf16.mxu0 0
        %699 = vmatpush1.bf16.msra.mxu0 0
        %700 = vmatprep.subr.bf16.mxu0 0
        %701 = vmatpush1.bf16.msra.mxu0 0
        %702 = vmatprep.subr.bf16.mxu0 0
        %703 = vmatpush1.bf16.msra.mxu0 0
        %704 = vmatprep.subr.bf16.mxu0 0
        %705 = vmatpush1.bf16.msra.mxu0 0
        %706 = vmatprep.subr.bf16.mxu0 0
        %707 = vmatpush1.bf16.msra.mxu0 0
        %708 = vmatprep.subr.bf16.mxu0 0
        %709 = vmatpush1.bf16.msra.mxu0 0
        %710 = vmatprep.subr.bf16.mxu0 0
        %711 = vmatpush1.bf16.msra.mxu0 0
        %712 = vmatprep.subr.bf16.mxu0 0
        %713 = vmatpush1.bf16.msra.mxu0 0
        %714 = vmatprep.mubr.bf16.mxu0 0
        %715 = vmatmul.mubr.bf16.gmra.mrb[0].mxu0 %v635
        %v716 = vpop.f32.mrb[0].mxu0
        %v717 = vadd.f32 %v527, %v716
        %v718 = vpop.f32.mrb[0].mxu0
        %v719 = vadd.f32 %v531, %v718
        %v720 = vpop.f32.mrb[0].mxu0
        %v721 = vadd.f32 %v527, %v720
        %v722 = vpop.f32.mrb[0].mxu0
        %v723 = vadd.f32 %v531, %v722
        %724 = vmatprep.mubr.bf16.mxu0 0
        %725 = vmatmul.mubr.bf16.gmra.mrb[0].mxu0 %v638
        %v726 = vpop.f32.mrb[0].mxu0
        %v727 = vadd.f32 %v527, %v726
        %v728 = vpop.f32.mrb[0].mxu0
        %v729 = vadd.f32 %v531, %v728
        %v730 = vpop.f32.mrb[0].mxu0
        %v731 = vadd.f32 %v527, %v730
        %v732 = vpop.f32.mrb[0].mxu0
        %v733 = vadd.f32 %v531, %v732
        %734 = vmatprep.mubr.bf16.mxu0 0
        %735 = vmatmul.mubr.bf16.gmra.mrb[0].mxu0 %v641
        %v736 = vpop.f32.mrb[0].mxu0
        %v737 = vadd.f32 %v527, %v736
        %v738 = vpop.f32.mrb[0].mxu0
        %v739 = vadd.f32 %v531, %v738
        %v740 = vpop.f32.mrb[0].mxu0
        %v741 = vadd.f32 %v527, %v740
        %v742 = vpop.f32.mrb[0].mxu0
        %v743 = vadd.f32 %v531, %v742
        %744 = vmatprep.mubr.bf16.mxu0 0
        %745 = vmatmul.mubr.bf16.gmra.mrb[0].mxu0 %v644
        %v746 = vpop.f32.mrb[0].mxu0
        %v747 = vadd.f32 %v527, %v746
        %v748 = vpop.f32.mrb[0].mxu0
        %v749 = vadd.f32 %v531, %v748
        %v750 = vpop.f32.mrb[0].mxu0
        %v751 = vadd.f32 %v527, %v750
        %v752 = vpop.f32.mrb[0].mxu0
        %v753 = vadd.f32 %v531, %v752
        %754 = vmatprep.mubr.bf16.mxu0 0
        %755 = vmatmul.mubr.bf16.gmra.mrb[0].mxu0 %v647
        %v756 = vpop.f32.mrb[0].mxu0
        %v757 = vadd.f32 %v527, %v756
        %v758 = vpop.f32.mrb[0].mxu0
        %v759 = vadd.f32 %v531, %v758
        %v760 = vpop.f32.mrb[0].mxu0
        %v761 = vadd.f32 %v527, %v760
        %v762 = vpop.f32.mrb[0].mxu0
        %v763 = vadd.f32 %v531, %v762
        %764 = vmatprep.mubr.bf16.mxu0 0
        %765 = vmatmul.mubr.bf16.gmra.mrb[0].mxu0 %v650
        %v766 = vpop.f32.mrb[0].mxu0
        %v767 = vadd.f32 %v527, %v766
        %v768 = vpop.f32.mrb[0].mxu0
        %v769 = vadd.f32 %v531, %v768
        %v770 = vpop.f32.mrb[0].mxu0
        %v771 = vadd.f32 %v527, %v770
        %v772 = vpop.f32.mrb[0].mxu0
        %v773 = vadd.f32 %v531, %v772
        %774 = vmatprep.mubr.bf16.mxu0 0
        %775 = vmatmul.mubr.bf16.gmra.mrb[0].mxu0 %v653
        %v776 = vpop.f32.mrb[0].mxu0
        %v777 = vadd.f32 %v527, %v776
        %v778 = vpop.f32.mrb[0].mxu0
        %v779 = vadd.f32 %v531, %v778
        %v780 = vpop.f32.mrb[0].mxu0
        %v781 = vadd.f32 %v527, %v780
        %v782 = vpop.f32.mrb[0].mxu0
        %v783 = vadd.f32 %v531, %v782
        %784 = vmatprep.mubr.bf16.mxu0 0
        %785 = vmatmul.mubr.bf16.gmra.mrb[0].mxu0 %v656
        %v786 = vpop.f32.mrb[0].mxu0
        %v787 = vadd.f32 %v527, %v786
        %v788 = vpop.f32.mrb[0].mxu0
        %v789 = vadd.f32 %v531, %v788
        %v790 = vpop.f32.mrb[0].mxu0
        %v791 = vadd.f32 %v527, %v790
        %v792 = vpop.f32.mrb[0].mxu0
        %v793 = vadd.f32 %v531, %v792
        %794 = vmatprep.mubr.bf16.mxu0 0
        %795 = vmatmul.mubr.bf16.gmra.mrb[0].mxu0 %v659
        %v796 = vpop.f32.mrb[0].mxu0
        %v797 = vadd.f32 %v527, %v796
        %v798 = vpop.f32.mrb[0].mxu0
        %v799 = vadd.f32 %v531, %v798
        %v800 = vpop.f32.mrb[0].mxu0
        %v801 = vadd.f32 %v527, %v800
        %v802 = vpop.f32.mrb[0].mxu0
        %v803 = vadd.f32 %v531, %v802
        %804 = vmatprep.mubr.bf16.mxu0 0
        %805 = vmatmul.mubr.bf16.gmra.mrb[0].mxu0 %v662
        %v806 = vpop.f32.mrb[0].mxu0
        %v807 = vadd.f32 %v527, %v806
        %v808 = vpop.f32.mrb[0].mxu0
        %v809 = vadd.f32 %v531, %v808
        %v810 = vpop.f32.mrb[0].mxu0
        %v811 = vadd.f32 %v527, %v810
        %v812 = vpop.f32.mrb[0].mxu0
        %v813 = vadd.f32 %v531, %v812
        %814 = vmatprep.mubr.bf16.mxu0 0
        %815 = vmatmul.mubr.bf16.gmra.mrb[0].mxu0 %v665
        %v816 = vpop.f32.mrb[0].mxu0
        %v817 = vadd.f32 %v527, %v816
        %v818 = vpop.f32.mrb[0].mxu0
        %v819 = vadd.f32 %v531, %v818
        %v820 = vpop.f32.mrb[0].mxu0
        %v821 = vadd.f32 %v527, %v820
        %v822 = vpop.f32.mrb[0].mxu0
        %v823 = vadd.f32 %v531, %v822
        %824 = vmatprep.mubr.bf16.mxu0 0
        %825 = vmatmul.mubr.bf16.gmra.mrb[0].mxu0 %v668
        %v826 = vpop.f32.mrb[0].mxu0
        %v827 = vadd.f32 %v527, %v826
        %v828 = vpop.f32.mrb[0].mxu0
        %v829 = vadd.f32 %v531, %v828
        %v830 = vpop.f32.mrb[0].mxu0
        %v831 = vadd.f32 %v527, %v830
        %v832 = vpop.f32.mrb[0].mxu0
        %v833 = vadd.f32 %v531, %v832
        %834 = vmatprep.mubr.bf16.mxu0 0
        %835 = vmatmul.mubr.bf16.gmra.mrb[0].mxu0 %v671
        %v836 = vpop.f32.mrb[0].mxu0
        %v837 = vadd.f32 %v527, %v836
        %v838 = vpop.f32.mrb[0].mxu0
        %v839 = vadd.f32 %v531, %v838
        %v840 = vpop.f32.mrb[0].mxu0
        %v841 = vadd.f32 %v527, %v840
        %v842 = vpop.f32.mrb[0].mxu0
        %v843 = vadd.f32 %v531, %v842
        %844 = vmatprep.mubr.bf16.mxu0 0
        %845 = vmatmul.mubr.bf16.gmra.mrb[0].mxu0 %v674
        %v846 = vpop.f32.mrb[0].mxu0
        %v847 = vadd.f32 %v527, %v846
        %v848 = vpop.f32.mrb[0].mxu0
        %v849 = vadd.f32 %v531, %v848
        %v850 = vpop.f32.mrb[0].mxu0
        %v851 = vadd.f32 %v527, %v850
        %v852 = vpop.f32.mrb[0].mxu0
        %v853 = vadd.f32 %v531, %v852
        %854 = vmatprep.mubr.bf16.mxu0 0
        %855 = vmatmul.mubr.bf16.gmra.mrb[0].mxu0 %v677
        %v856 = vpop.f32.mrb[0].mxu0
        %v857 = vadd.f32 %v527, %v856
        %v858 = vpop.f32.mrb[0].mxu0
        %v859 = vadd.f32 %v531, %v858
        %v860 = vpop.f32.mrb[0].mxu0
        %v861 = vadd.f32 %v527, %v860
        %v862 = vpop.f32.mrb[0].mxu0
        %v863 = vadd.f32 %v531, %v862
        %864 = vmatprep.mubr.bf16.mxu0 0
        %865 = vmatmul.mubr.bf16.gmra.mrb[0].mxu0 %v680
        %v866 = vpop.f32.mrb[0].mxu0
        %v867 = vadd.f32 %v527, %v866
        %v868 = vpop.f32.mrb[0].mxu0
        %v869 = vadd.f32 %v531, %v868
        %v870 = vpop.f32.mrb[0].mxu0
        %v871 = vadd.f32 %v527, %v870
        %v872 = vpop.f32.mrb[0].mxu0
        %v873 = vadd.f32 %v531, %v872
        %874 = vdwg.mxu0
        %v875 = vmul.f32 %v480, 0.088388346
        %v876 = vmul.f32 %v484, 0.088388346
        %v877 = vmul.f32 %v490, 0.088388346
        %v878 = vmul.f32 %v494, 0.088388346
        %v879 = vmul.f32 %v500, 0.088388346
        %v880 = vmul.f32 %v504, 0.088388346
        %v881 = vmul.f32 %v510, 0.088388346
        %v882 = vmul.f32 %v514, 0.088388346
        %v883 = vpack.c.bf16 %v876, %v875
        %v884 = vpack.c.bf16 %v878, %v877
        %v885 = vpack.c.bf16 %v880, %v879
        %v886 = vpack.c.bf16 %v882, %v881
        %v887 = vpack.c.bf16 %v721, %v717
        %v888 = vpack.c.bf16 %v731, %v727
        %v889 = vpack.c.bf16 %v741, %v737
        %v890 = vpack.c.bf16 %v751, %v747
        %v891 = vpack.c.bf16 %v761, %v757
        %v892 = vpack.c.bf16 %v771, %v767
        %v893 = vpack.c.bf16 %v781, %v777
        %v894 = vpack.c.bf16 %v791, %v787
        %v895 = vpack.c.bf16 %v801, %v797
        %v896 = vpack.c.bf16 %v811, %v807
        %v897 = vpack.c.bf16 %v821, %v817
        %v898 = vpack.c.bf16 %v831, %v827
        %v899 = vpack.c.bf16 %v841, %v837
        %v900 = vpack.c.bf16 %v851, %v847
        %v901 = vpack.c.bf16 %v861, %v857
        %v902 = vpack.c.bf16 %v871, %v867
        %v903 = vpack.c.bf16 %v723, %v719
        %v904 = vpack.c.bf16 %v733, %v729
        %v905 = vpack.c.bf16 %v743, %v739
        %v906 = vpack.c.bf16 %v753, %v749
        %v907 = vpack.c.bf16 %v763, %v759
        %v908 = vpack.c.bf16 %v773, %v769
        %v909 = vpack.c.bf16 %v783, %v779
        %v910 = vpack.c.bf16 %v793, %v789
        %v911 = vpack.c.bf16 %v803, %v799
        %v912 = vpack.c.bf16 %v813, %v809
        %v913 = vpack.c.bf16 %v823, %v819
        %v914 = vpack.c.bf16 %v833, %v829
        %v915 = vpack.c.bf16 %v843, %v839
        %v916 = vpack.c.bf16 %v853, %v849
        %v917 = vpack.c.bf16 %v863, %v859
        %v918 = vpack.c.bf16 %v873, %v869
        %919 = vmatprep.subr.bf16.mxu0 0
        %920 = vmatpush1.bf16.xpose.msra.mxu0 %v887
        %921 = vmatprep.subr.bf16.mxu0 0
        %922 = vmatpush1.bf16.xpose.msra.mxu0 %v888
        %923 = vmatprep.subr.bf16.mxu0 0
        %924 = vmatpush1.bf16.xpose.msra.mxu0 %v889
        %925 = vmatprep.subr.bf16.mxu0 0
        %926 = vmatpush1.bf16.xpose.msra.mxu0 %v890
        %927 = vmatprep.subr.bf16.mxu0 0
        %928 = vmatpush1.bf16.xpose.msra.mxu0 %v891
        %929 = vmatprep.subr.bf16.mxu0 0
        %930 = vmatpush1.bf16.xpose.msra.mxu0 %v892
        %931 = vmatprep.subr.bf16.mxu0 0
        %932 = vmatpush1.bf16.xpose.msra.mxu0 %v893
        %933 = vmatprep.subr.bf16.mxu0 0
        %934 = vmatpush1.bf16.xpose.msra.mxu0 %v894
        %935 = vmatprep.subr.bf16.mxu0 0
        %936 = vmatpush1.bf16.xpose.msra.mxu0 0
        %937 = vmatprep.subr.bf16.mxu0 0
        %938 = vmatpush1.bf16.xpose.msra.mxu0 0
        %939 = vmatprep.subr.bf16.mxu0 0
        %940 = vmatpush1.bf16.xpose.msra.mxu0 0
        %941 = vmatprep.subr.bf16.mxu0 0
        %942 = vmatpush1.bf16.xpose.msra.mxu0 0
        %943 = vmatprep.subr.bf16.mxu0 0
        %944 = vmatpush1.bf16.xpose.msra.mxu0 0
        %945 = vmatprep.subr.bf16.mxu0 0
        %946 = vmatpush1.bf16.xpose.msra.mxu0 0
        %947 = vmatprep.subr.bf16.mxu0 0
        %948 = vmatpush1.bf16.xpose.msra.mxu0 0
        %949 = vmatprep.subr.bf16.mxu0 0
        %950 = vmatpush1.bf16.xpose.msra.mxu0 0
        %951 = vmatprep.mubr.bf16.mxu0 0
        %952 = vmatmul.mubr.bf16.gmra.mrb[0].mxu0 %v883
        %v953 = vpop.f32.mrb[0].mxu0
        %v954 = vadd.f32 0.0, %v953
        %v955 = vpop.f32.mrb[0].mxu0
        %v956 = vpop.f32.mrb[0].mxu0
        %v957 = vadd.f32 0.0, %v956
        %v958 = vpop.f32.mrb[0].mxu0
        %959 = vmatprep.mubr.bf16.mxu0 0
        %960 = vmatmul.mubr.bf16.gmra.mrb[0].mxu0 %v884
        %v961 = vpop.f32.mrb[0].mxu0
        %v962 = vadd.f32 0.0, %v961
        %v963 = vpop.f32.mrb[0].mxu0
        %v964 = vpop.f32.mrb[0].mxu0
        %v965 = vadd.f32 0.0, %v964
        %v966 = vpop.f32.mrb[0].mxu0
        %967 = vdwg.mxu0
        %968 = vmatprep.subr.bf16.mxu0 0
        %969 = vmatpush1.bf16.xpose.msra.mxu0 %v895
        %970 = vmatprep.subr.bf16.mxu0 0
        %971 = vmatpush1.bf16.xpose.msra.mxu0 %v896
        %972 = vmatprep.subr.bf16.mxu0 0
        %973 = vmatpush1.bf16.xpose.msra.mxu0 %v897
        %974 = vmatprep.subr.bf16.mxu0 0
        %975 = vmatpush1.bf16.xpose.msra.mxu0 %v898
        %976 = vmatprep.subr.bf16.mxu0 0
        %977 = vmatpush1.bf16.xpose.msra.mxu0 %v899
        %978 = vmatprep.subr.bf16.mxu0 0
        %979 = vmatpush1.bf16.xpose.msra.mxu0 %v900
        %980 = vmatprep.subr.bf16.mxu0 0
        %981 = vmatpush1.bf16.xpose.msra.mxu0 %v901
        %982 = vmatprep.subr.bf16.mxu0 0
        %983 = vmatpush1.bf16.xpose.msra.mxu0 %v902
        %984 = vmatprep.subr.bf16.mxu0 0
        %985 = vmatpush1.bf16.xpose.msra.mxu0 0
        %986 = vmatprep.subr.bf16.mxu0 0
        %987 = vmatpush1.bf16.xpose.msra.mxu0 0
        %988 = vmatprep.subr.bf16.mxu0 0
        %989 = vmatpush1.bf16.xpose.msra.mxu0 0
        %990 = vmatprep.subr.bf16.mxu0 0
        %991 = vmatpush1.bf16.xpose.msra.mxu0 0
        %992 = vmatprep.subr.bf16.mxu0 0
        %993 = vmatpush1.bf16.xpose.msra.mxu0 0
        %994 = vmatprep.subr.bf16.mxu0 0
        %995 = vmatpush1.bf16.xpose.msra.mxu0 0
        %996 = vmatprep.subr.bf16.mxu0 0
        %997 = vmatpush1.bf16.xpose.msra.mxu0 0
        %998 = vmatprep.subr.bf16.mxu0 0
        %999 = vmatpush1.bf16.xpose.msra.mxu0 0
        %1000 = vmatprep.mubr.bf16.mxu0 0
        %1001 = vmatmul.mubr.bf16.gmra.mrb[0].mxu0 %v885
        %v1002 = vpop.f32.mrb[0].mxu0
        %v1003 = vadd.f32 0.0, %v1002
        %v1004 = vpop.f32.mrb[0].mxu0
        %v1005 = vpop.f32.mrb[0].mxu0
        %v1006 = vadd.f32 0.0, %v1005
        %v1007 = vpop.f32.mrb[0].mxu0
        %1008 = vmatprep.mubr.bf16.mxu0 0
        %1009 = vmatmul.mubr.bf16.gmra.mrb[0].mxu0 %v886
        %v1010 = vpop.f32.mrb[0].mxu0
        %v1011 = vadd.f32 0.0, %v1010
        %v1012 = vpop.f32.mrb[0].mxu0
        %v1013 = vpop.f32.mrb[0].mxu0
        %v1014 = vadd.f32 0.0, %v1013
        %v1015 = vpop.f32.mrb[0].mxu0
        %1016 = vdwg.mxu0
        %1017 = vmax.xlane.f32.xlu0 %v954
        %v1018 = vpop.xlane.xlu0 %1017
        %1019 = vmax.xlane.f32.xlu0 %v957
        %v1020 = vpop.xlane.xlu0 %1019
        %1021 = vmax.xlane.f32.xlu0 %v962
        %v1022 = vpop.xlane.xlu0 %1021
        %1023 = vmax.xlane.f32.xlu0 %v965
        %v1024 = vpop.xlane.xlu0 %1023
        %1025 = vmax.xlane.f32.xlu0 %v1003
        %v1026 = vpop.xlane.xlu0 %1025
        %1027 = vmax.xlane.f32.xlu0 %v1006
        %v1028 = vpop.xlane.xlu0 %1027
        %1029 = vmax.xlane.f32.xlu0 %v1011
        %v1030 = vpop.xlane.xlu0 %1029
        %1031 = vmax.xlane.f32.xlu0 %v1014
        %v1032 = vpop.xlane.xlu0 %1031
        %v1033 = vsub.f32 %v954, %v1018
        %v1034 = vsub.f32 %v957, %v1020
        %v1035 = vsub.f32 %v962, %v1022
        %v1036 = vsub.f32 %v965, %v1024
        %v1037 = vsub.f32 %v1003, %v1026
        %v1038 = vsub.f32 %v1006, %v1028
        %v1039 = vsub.f32 %v1011, %v1030
        %v1040 = vsub.f32 %v1014, %v1032
        %v1041 = vmul.f32 %v1033, 1.442695
        %v1042 = vpow.pop %v1041
        %v1043 = vmul.f32 %v1034, 1.442695
        %v1044 = vpow.pop %v1043
        %v1045 = vmul.f32 %v1035, 1.442695
        %v1046 = vpow.pop %v1045
        %v1047 = vmul.f32 %v1036, 1.442695
        %v1048 = vpow.pop %v1047
        %v1049 = vmul.f32 %v1037, 1.442695
        %v1050 = vpow.pop %v1049
        %v1051 = vmul.f32 %v1038, 1.442695
        %v1052 = vpow.pop %v1051
        %v1053 = vmul.f32 %v1039, 1.442695
        %v1054 = vpow.pop %v1053
        %v1055 = vmul.f32 %v1040, 1.442695
        %v1056 = vpow.pop %v1055
        %1057 = vadd.xlane.f32.xlu0 %v1042
        %v1058 = vpop.xlane.xlu0 %1057
        %1059 = vadd.xlane.f32.xlu0 %v1044
        %v1060 = vpop.xlane.xlu0 %1059
        %1061 = vadd.xlane.f32.xlu0 %v1046
        %v1062 = vpop.xlane.xlu0 %1061
        %1063 = vadd.xlane.f32.xlu0 %v1048
        %v1064 = vpop.xlane.xlu0 %1063
        %1065 = vadd.xlane.f32.xlu0 %v1050
        %v1066 = vpop.xlane.xlu0 %1065
        %1067 = vadd.xlane.f32.xlu0 %v1052
        %v1068 = vpop.xlane.xlu0 %1067
        %1069 = vadd.xlane.f32.xlu0 %v1054
        %v1070 = vpop.xlane.xlu0 %1069
        %1071 = vadd.xlane.f32.xlu0 %v1056
        %v1072 = vpop.xlane.xlu0 %1071
        %v1073 = vrcp.pop %v1058
        %v1074 = vrcp.pop %v1060
        %v1075 = vrcp.pop %v1062
        %v1076 = vrcp.pop %v1064
        %v1077 = vrcp.pop %v1066
        %v1078 = vrcp.pop %v1068
        %v1079 = vrcp.pop %v1070
        %v1080 = vrcp.pop %v1072
        %v1081 = vmul.f32 %v1042, %v1073
        %v1082 = vmul.f32 %v1044, %v1074
        %v1083 = vmul.f32 %v1046, %v1075
        %v1084 = vmul.f32 %v1048, %v1076
        %v1085 = vmul.f32 %v1050, %v1077
        %v1086 = vmul.f32 %v1052, %v1078
        %v1087 = vmul.f32 %v1054, %v1079
        %v1088 = vmul.f32 %v1056, %v1080
        %v1089 = vpack.c.bf16 %v1082, %v1081
        %v1090 = vpack.c.bf16 %v1084, %v1083
        %v1091 = vpack.c.bf16 %v1086, %v1085
        %v1092 = vpack.c.bf16 %v1088, %v1087
        %1093 = vmatprep.subr.bf16.mxu0 0
        %1094 = vmatpush1.bf16.msra.mxu0 %v903
        %1095 = vmatprep.subr.bf16.mxu0 0
        %1096 = vmatpush1.bf16.msra.mxu0 %v904
        %1097 = vmatprep.subr.bf16.mxu0 0
        %1098 = vmatpush1.bf16.msra.mxu0 %v905
        %1099 = vmatprep.subr.bf16.mxu0 0
        %1100 = vmatpush1.bf16.msra.mxu0 %v906
        %1101 = vmatprep.subr.bf16.mxu0 0
        %1102 = vmatpush1.bf16.msra.mxu0 %v907
        %1103 = vmatprep.subr.bf16.mxu0 0
        %1104 = vmatpush1.bf16.msra.mxu0 %v908
        %1105 = vmatprep.subr.bf16.mxu0 0
        %1106 = vmatpush1.bf16.msra.mxu0 %v909
        %1107 = vmatprep.subr.bf16.mxu0 0
        %1108 = vmatpush1.bf16.msra.mxu0 %v910
        %1109 = vmatprep.subr.bf16.mxu0 0
        %1110 = vmatpush1.bf16.msra.mxu0 0
        %1111 = vmatprep.subr.bf16.mxu0 0
        %1112 = vmatpush1.bf16.msra.mxu0 0
        %1113 = vmatprep.subr.bf16.mxu0 0
        %1114 = vmatpush1.bf16.msra.mxu0 0
        %1115 = vmatprep.subr.bf16.mxu0 0
        %1116 = vmatpush1.bf16.msra.mxu0 0
        %1117 = vmatprep.subr.bf16.mxu0 0
        %1118 = vmatpush1.bf16.msra.mxu0 0
        %1119 = vmatprep.subr.bf16.mxu0 0
        %1120 = vmatpush1.bf16.msra.mxu0 0
        %1121 = vmatprep.subr.bf16.mxu0 0
        %1122 = vmatpush1.bf16.msra.mxu0 0
        %1123 = vmatprep.subr.bf16.mxu0 0
        %1124 = vmatpush1.bf16.msra.mxu0 0
        %1125 = vmatprep.mubr.bf16.mxu0 0
        %1126 = vmatmul.mubr.bf16.gmra.mrb[0].mxu0 %v1089
        %v1127 = vpop.f32.mrb[0].mxu0
        %v1128 = vadd.f32 0.0, %v1127
        %v1129 = vpop.f32.mrb[0].mxu0
        %v1130 = vpop.f32.mrb[0].mxu0
        %v1131 = vadd.f32 0.0, %v1130
        %v1132 = vpop.f32.mrb[0].mxu0
        %1133 = vmatprep.mubr.bf16.mxu0 0
        %1134 = vmatmul.mubr.bf16.gmra.mrb[0].mxu0 %v1090
        %v1135 = vpop.f32.mrb[0].mxu0
        %v1136 = vadd.f32 0.0, %v1135
        %v1137 = vpop.f32.mrb[0].mxu0
        %v1138 = vpop.f32.mrb[0].mxu0
        %v1139 = vadd.f32 0.0, %v1138
        %v1140 = vpop.f32.mrb[0].mxu0
        %1141 = vdwg.mxu0
        %1142 = vmatprep.subr.bf16.mxu0 0
        %1143 = vmatpush1.bf16.msra.mxu0 %v911
        %1144 = vmatprep.subr.bf16.mxu0 0
        %1145 = vmatpush1.bf16.msra.mxu0 %v912
        %1146 = vmatprep.subr.bf16.mxu0 0
        %1147 = vmatpush1.bf16.msra.mxu0 %v913
        %1148 = vmatprep.subr.bf16.mxu0 0
        %1149 = vmatpush1.bf16.msra.mxu0 %v914
        %1150 = vmatprep.subr.bf16.mxu0 0
        %1151 = vmatpush1.bf16.msra.mxu0 %v915
        %1152 = vmatprep.subr.bf16.mxu0 0
        %1153 = vmatpush1.bf16.msra.mxu0 %v916
        %1154 = vmatprep.subr.bf16.mxu0 0
        %1155 = vmatpush1.bf16.msra.mxu0 %v917
        %1156 = vmatprep.subr.bf16.mxu0 0
        %1157 = vmatpush1.bf16.msra.mxu0 %v918
        %1158 = vmatprep.subr.bf16.mxu0 0
        %1159 = vmatpush1.bf16.msra.mxu0 0
        %1160 = vmatprep.subr.bf16.mxu0 0
        %1161 = vmatpush1.bf16.msra.mxu0 0
        %1162 = vmatprep.subr.bf16.mxu0 0
        %1163 = vmatpush1.bf16.msra.mxu0 0
        %1164 = vmatprep.subr.bf16.mxu0 0
        %1165 = vmatpush1.bf16.msra.mxu0 0
        %1166 = vmatprep.subr.bf16.mxu0 0
        %1167 = vmatpush1.bf16.msra.mxu0 0
        %1168 = vmatprep.subr.bf16.mxu0 0
        %1169 = vmatpush1.bf16.msra.mxu0 0
        %1170 = vmatprep.subr.bf16.mxu0 0
        %1171 = vmatpush1.bf16.msra.mxu0 0
        %1172 = vmatprep.subr.bf16.mxu0 0
        %1173 = vmatpush1.bf16.msra.mxu0 0
        %1174 = vmatprep.mubr.bf16.mxu0 0
        %1175 = vmatmul.mubr.bf16.gmra.mrb[0].mxu0 %v1091
        %v1176 = vpop.f32.mrb[0].mxu0
        %v1177 = vadd.f32 0.0, %v1176
        %v1178 = vpop.f32.mrb[0].mxu0
        %v1179 = vpop.f32.mrb[0].mxu0
        %v1180 = vadd.f32 0.0, %v1179
        %v1181 = vpop.f32.mrb[0].mxu0
        %1182 = vmatprep.mubr.bf16.mxu0 0
        %1183 = vmatmul.mubr.bf16.gmra.mrb[0].mxu0 %v1092
        %v1184 = vpop.f32.mrb[0].mxu0
        %v1185 = vadd.f32 0.0, %v1184
        %v1186 = vpop.f32.mrb[0].mxu0
        %v1187 = vpop.f32.mrb[0].mxu0
        %v1188 = vadd.f32 0.0, %v1187
        %v1189 = vpop.f32.mrb[0].mxu0
        %1190 = vdwg.mxu0
        %1191 = vadd.xlane.f32.xlu0 %v1128
        %v1192 = vpop.xlane.xlu0 %1191
        %1193 = vadd.xlane.f32.xlu0 %v1131
        %v1194 = vpop.xlane.xlu0 %1193
        %1195 = vadd.xlane.f32.xlu0 %v1136
        %v1196 = vpop.xlane.xlu0 %1195
        %1197 = vadd.xlane.f32.xlu0 %v1139
        %v1198 = vpop.xlane.xlu0 %1197
        %1199 = vadd.xlane.f32.xlu0 %v1177
        %v1200 = vpop.xlane.xlu0 %1199
        %1201 = vadd.xlane.f32.xlu0 %v1180
        %v1202 = vpop.xlane.xlu0 %1201
        %1203 = vadd.xlane.f32.xlu0 %v1185
        %v1204 = vpop.xlane.xlu0 %1203
        %1205 = vadd.xlane.f32.xlu0 %v1188
        %v1206 = vpop.xlane.xlu0 %1205
        %v1207 = vadd.f32 %v1192, %v1194
        %v1208 = vadd.f32 %v1207, %v1196
        %v1209 = vadd.f32 %v1208, %v1198
        %v1210 = vrot.slane %v1209, 4
        %v1211 = vadd.f32 %v1209, %v1210
        %v1212 = vrot.slane %v1211, 2
        %v1213 = vadd.f32 %v1211, %v1212
        %v1214 = vrot.slane %v1213, 1
        %v1215 = vadd.f32 %v1213, %v1214
        %v1216 = vadd.f32 %v1200, %v1202
        %v1217 = vadd.f32 %v1216, %v1204
        %v1218 = vadd.f32 %v1217, %v1206
        %v1219 = vrot.slane %v1218, 4
        %v1220 = vadd.f32 %v1218, %v1219
        %v1221 = vrot.slane %v1220, 2
        %v1222 = vadd.f32 %v1220, %v1221
        %v1223 = vrot.slane %v1222, 1
        %v1224 = vadd.f32 %v1222, %v1223
        %v1225 = vmul.f32 %v1215, 0.00024414063
        %v1226 = vmul.f32 %v1224, 0.00024414063
        %v1227 = vsub.f32 %v1128, %v1225
        %v1228 = vsub.f32 %v1131, %v1225
        %v1229 = vsub.f32 %v1136, %v1225
        %v1230 = vsub.f32 %v1139, %v1225
        %v1231 = vsub.f32 %v1177, %v1226
        %v1232 = vsub.f32 %v1180, %v1226
        %v1233 = vsub.f32 %v1185, %v1226
        %v1234 = vsub.f32 %v1188, %v1226
        %v1235 = vmul.f32 %v1227, %v1227
        %v1236 = vmul.f32 %v1228, %v1228
        %v1237 = vmul.f32 %v1229, %v1229
        %v1238 = vmul.f32 %v1230, %v1230
        %v1239 = vmul.f32 %v1231, %v1231
        %v1240 = vmul.f32 %v1232, %v1232
        %v1241 = vmul.f32 %v1233, %v1233
        %v1242 = vmul.f32 %v1234, %v1234
        %1243 = vadd.xlane.f32.xlu0 %v1235
        %v1244 = vpop.xlane.xlu0 %1243
        %1245 = vadd.xlane.f32.xlu0 %v1236
        %v1246 = vpop.xlane.xlu0 %1245
        %1247 = vadd.xlane.f32.xlu0 %v1237
        %v1248 = vpop.xlane.xlu0 %1247
        %1249 = vadd.xlane.f32.xlu0 %v1238
        %v1250 = vpop.xlane.xlu0 %1249
        %1251 = vadd.xlane.f32.xlu0 %v1239
        %v1252 = vpop.xlane.xlu0 %1251
        %1253 = vadd.xlane.f32.xlu0 %v1240
        %v1254 = vpop.xlane.xlu0 %1253
        %1255 = vadd.xlane.f32.xlu0 %v1241
        %v1256 = vpop.xlane.xlu0 %1255
        %1257 = vadd.xlane.f32.xlu0 %v1242
        %v1258 = vpop.xlane.xlu0 %1257
        %v1259 = vadd.f32 %v1244, %v1246
        %v1260 = vadd.f32 %v1259, %v1248
        %v1261 = vadd.f32 %v1260, %v1250
        %v1262 = vrot.slane %v1261, 4
        %v1263 = vadd.f32 %v1261, %v1262
        %v1264 = vrot.slane %v1263, 2
        %v1265 = vadd.f32 %v1263, %v1264
        %v1266 = vrot.slane %v1265, 1
        %v1267 = vadd.f32 %v1265, %v1266
        %v1268 = vadd.f32 %v1252, %v1254
        %v1269 = vadd.f32 %v1268, %v1256
        %v1270 = vadd.f32 %v1269, %v1258
        %v1271 = vrot.slane %v1270, 4
        %v1272 = vadd.f32 %v1270, %v1271
        %v1273 = vrot.slane %v1272, 2
        %v1274 = vadd.f32 %v1272, %v1273
        %v1275 = vrot.slane %v1274, 1
        %v1276 = vadd.f32 %v1274, %v1275
        %v1277 = vmul.f32 %v1267, 0.00024414063
        %v1278 = vmul.f32 %v1276, 0.00024414063
        %v1279 = vadd.f32 %v1277, 1e-05
        %v1280 = vadd.f32 %v1278, 1e-05
        %v1281 = vrsqrt.pop %v1279
        %v1282 = vrsqrt.pop %v1280
        %v1283 = vmul.f32 %v1227, %v1281
        %v1284 = vmul.f32 %v1228, %v1281
        %v1285 = vmul.f32 %v1229, %v1281
        %v1286 = vmul.f32 %v1230, %v1281
        %v1287 = vmul.f32 %v1231, %v1282
        %v1288 = vmul.f32 %v1232, %v1282
        %v1289 = vmul.f32 %v1233, %v1282
        %v1290 = vmul.f32 %v1234, %v1282
        %v1291 = vmax.f32 %v1283, 0.0
        %v1292 = vmax.f32 %v1284, 0.0
        %v1293 = vmax.f32 %v1285, 0.0
        %v1294 = vmax.f32 %v1286, 0.0
        %v1295 = vmax.f32 %v1287, 0.0
        %v1296 = vmax.f32 %v1288, 0.0
        %v1297 = vmax.f32 %v1289, 0.0
        %v1298 = vmax.f32 %v1290, 0.0
        %v1299 = vpack.c.bf16 %v1292, %v1291
        %v1300 = vpack.c.bf16 %v1294, %v1293
        %v1301 = vpack.c.bf16 %v1296, %v1295
        %v1302 = vpack.c.bf16 %v1298, %v1297
        %v1303 = vld [vmem:[%s6] sm:$0xf]
        %v1304 = vld [vmem:[%s6 + $0x4] sm:$0xf]
        %v1305 = vld [vmem:[%s6 + $0x8] sm:$0xf]
        %v1306 = vld [vmem:[%s6 + $0xc] sm:$0xf]
        %v1307 = vld [vmem:[%s6 + $0x10] sm:$0xf]
        %v1308 = vld [vmem:[%s6 + $0x14] sm:$0xf]
        %v1309 = vld [vmem:[%s6 + $0x18] sm:$0xf]
        %v1310 = vld [vmem:[%s6 + $0x1c] sm:$0xf]
        %v1311 = vld [vmem:[%s6 + $0x20] sm:$0xf]
        %v1312 = vld [vmem:[%s6 + $0x24] sm:$0xf]
        %v1313 = vld [vmem:[%s6 + $0x28] sm:$0xf]
        %v1314 = vld [vmem:[%s6 + $0x2c] sm:$0xf]
        %v1315 = vld [vmem:[%s6 + $0x30] sm:$0xf]
        %v1316 = vld [vmem:[%s6 + $0x34] sm:$0xf]
        %v1317 = vld [vmem:[%s6 + $0x38] sm:$0xf]
        %v1318 = vld [vmem:[%s6 + $0x3c] sm:$0xf]
        %v1319 = vld [vmem:[%s7] sm:$0x1]
        %v1321 = vlaneseq
        %v1322 = vshrl.u32 %v1321, 7
        %v1323 = vsub.s32 0, %v1322
        %v1324 = vrot.slane %v1319, %v1323
        %v1342 = vunpack.c.l.b16 %v1303
        %v1343 = vunpack.c.l.b16 %v1304
        %v1344 = vunpack.c.l.b16 %v1305
        %v1345 = vunpack.c.l.b16 %v1306
        %v1346 = vunpack.c.l.b16 %v1307
        %v1347 = vunpack.c.l.b16 %v1308
        %v1348 = vunpack.c.l.b16 %v1309
        %v1349 = vunpack.c.l.b16 %v1310
        %v1350 = vunpack.c.l.b16 %v1311
        %v1351 = vunpack.c.l.b16 %v1312
        %v1352 = vunpack.c.l.b16 %v1313
        %v1353 = vunpack.c.l.b16 %v1314
        %v1354 = vunpack.c.l.b16 %v1315
        %v1355 = vunpack.c.l.b16 %v1316
        %v1356 = vunpack.c.l.b16 %v1317
        %v1357 = vunpack.c.l.b16 %v1318
        %v1358 = vpack.c.b16 %v1343, %v1342
        %v1359 = vpack.c.b16 %v1345, %v1344
        %v1360 = vpack.c.b16 %v1347, %v1346
        %v1361 = vpack.c.b16 %v1349, %v1348
        %v1362 = vpack.c.b16 %v1351, %v1350
        %v1363 = vpack.c.b16 %v1353, %v1352
        %v1364 = vpack.c.b16 %v1355, %v1354
        %v1365 = vpack.c.b16 %v1357, %v1356
        %1374 = vmatprep.subr.bf16.mxu0 0
        %1375 = vmatpush1.bf16.msra.mxu0 %v1358
        %1376 = vmatprep.subr.bf16.mxu0 0
        %1377 = vmatpush1.bf16.msra.mxu0 %v1359
        %1378 = vmatprep.subr.bf16.mxu0 0
        %1379 = vmatpush1.bf16.msra.mxu0 %v1360
        %1380 = vmatprep.subr.bf16.mxu0 0
        %1381 = vmatpush1.bf16.msra.mxu0 %v1361
        %1382 = vmatprep.subr.bf16.mxu0 0
        %1383 = vmatpush1.bf16.msra.mxu0 %v1362
        %1384 = vmatprep.subr.bf16.mxu0 0
        %1385 = vmatpush1.bf16.msra.mxu0 %v1363
        %1386 = vmatprep.subr.bf16.mxu0 0
        %1387 = vmatpush1.bf16.msra.mxu0 %v1364
        %1388 = vmatprep.subr.bf16.mxu0 0
        %1389 = vmatpush1.bf16.msra.mxu0 %v1365
        %1390 = vmatprep.subr.bf16.mxu0 0
        %1391 = vmatpush1.bf16.msra.mxu0 0
        %1392 = vmatprep.subr.bf16.mxu0 0
        %1393 = vmatpush1.bf16.msra.mxu0 0
        %1394 = vmatprep.subr.bf16.mxu0 0
        %1395 = vmatpush1.bf16.msra.mxu0 0
        %1396 = vmatprep.subr.bf16.mxu0 0
        %1397 = vmatpush1.bf16.msra.mxu0 0
        %1398 = vmatprep.subr.bf16.mxu0 0
        %1399 = vmatpush1.bf16.msra.mxu0 0
        %1400 = vmatprep.subr.bf16.mxu0 0
        %1401 = vmatpush1.bf16.msra.mxu0 0
        %1402 = vmatprep.subr.bf16.mxu0 0
        %1403 = vmatpush1.bf16.msra.mxu0 0
        %1404 = vmatprep.subr.bf16.mxu0 0
        %1405 = vmatpush1.bf16.msra.mxu0 0
        %1406 = vmatprep.mubr.bf16.mxu0 0
        %1407 = vmatmul.mubr.bf16.gmra.mrb[0].mxu0 %v1299
        %v1408 = vpop.f32.mrb[0].mxu0
        %v1409 = vadd.f32 %v1324, %v1408
        %v1410 = vpop.f32.mrb[0].mxu0
        %v1411 = vpop.f32.mrb[0].mxu0
        %v1412 = vadd.f32 %v1324, %v1411
        %v1413 = vpop.f32.mrb[0].mxu0
        %1414 = vmatprep.mubr.bf16.mxu0 0
        %1415 = vmatmul.mubr.bf16.gmra.mrb[0].mxu0 %v1300
        %v1416 = vpop.f32.mrb[0].mxu0
        %v1417 = vadd.f32 %v1324, %v1416
        %v1418 = vpop.f32.mrb[0].mxu0
        %v1419 = vpop.f32.mrb[0].mxu0
        %v1420 = vadd.f32 %v1324, %v1419
        %v1421 = vpop.f32.mrb[0].mxu0
        %1422 = vmatprep.mubr.bf16.mxu0 0
        %1423 = vmatmul.mubr.bf16.gmra.mrb[0].mxu0 %v1301
        %v1424 = vpop.f32.mrb[0].mxu0
        %v1425 = vadd.f32 %v1324, %v1424
        %v1426 = vpop.f32.mrb[0].mxu0
        %v1427 = vpop.f32.mrb[0].mxu0
        %v1428 = vadd.f32 %v1324, %v1427
        %v1429 = vpop.f32.mrb[0].mxu0
        %1430 = vmatprep.mubr.bf16.mxu0 0
        %1431 = vmatmul.mubr.bf16.gmra.mrb[0].mxu0 %v1302
        %v1432 = vpop.f32.mrb[0].mxu0
        %v1433 = vadd.f32 %v1324, %v1432
        %v1434 = vpop.f32.mrb[0].mxu0
        %v1435 = vpop.f32.mrb[0].mxu0
        %v1436 = vadd.f32 %v1324, %v1435
        %v1437 = vpop.f32.mrb[0].mxu0
        %1438 = vdwg.mxu0
        %v1439 = vadd.f32 %v1409, %v482
        %v1440 = vadd.f32 %v1412, %v486
        %v1441 = vadd.f32 %v1417, %v492
        %v1442 = vadd.f32 %v1420, %v496
        %v1443 = vadd.f32 %v1425, %v502
        %v1444 = vadd.f32 %v1428, %v506
        %v1445 = vadd.f32 %v1433, %v512
        %v1446 = vadd.f32 %v1436, %v516
        %1447 = vst [vmem:[%s319] sm:$0xff] %v1439
        %1448 = vst [vmem:[%s319 + $0x8] sm:$0xff] %v1440
        %1449 = vst [vmem:[%s319 + $0x10] sm:$0xff] %v1441
        %1450 = vst [vmem:[%s319 + $0x18] sm:$0xff] %v1442
        %1451 = vst [vmem:[%s319 + $0x20] sm:$0xff] %v1443
        %1452 = vst [vmem:[%s319 + $0x28] sm:$0xff] %v1444
        %1453 = vst [vmem:[%s319 + $0x30] sm:$0xff] %v1445
        %1454 = vst [vmem:[%s319 + $0x38] sm:$0xff] %v1446
        %s1455 = sand.u32 %s208, 1
        %s1456 = scalar_lea.sflag [#allocation3], %s1455
        %s1457 = sand.u32 %s208, 1
        %s1458 = smul.addr %s1457, 64
        %s1459 = scalar_lea.vmem [#allocation2], %s1458
        // Predicated region
        $region53: #{tpu_custom_call.1} parent=51 // pred_check
          %p1460 = pneg %p218
        $region54: #{tpu_custom_call.1} parent=51 // pred_check_branch
          %1462 = sbr.rel (%p1460) target = $region56
        $region55: #{tpu_custom_call.1} parent=51 // pred_region
          %s1463 = smul.u32 2, %s22
          %s1465 = ssub.s32 1024, 1024
          %1466 = vsyncadd %s1456, %s1465
          %s1467 = smul.addr %s1463, 4
          %s1468 = smul.addr %s1467, 128
          %s1469 = scalar_lea.hbm %s8, %s1468
          %s1470 = sshll.u32 %s1459, 4
          %s1471 = int_to_ptr.vmem [resolvable:$true] %s1470
          %1476 = dma.vmem_to_hbm [thread:$0]  %s1471, 1024, %s1469, %s1456, 128, 128, 8
        $region56: #{tpu_custom_call.1} parent=51 // pred_fallthru
          _
      $region52: #{tpu_custom_call.1} parent=5 // pred_fallthru
        _
      %p1477 = scmp.le.s32.totalorder 2, %s17
      // Predicated region
      $region57: #{tpu_custom_call.1} parent=5 // pred_check
        %p1478 = pneg %p1477
      $region58: #{tpu_custom_call.1} parent=5 // pred_check_branch
        %1480 = sbr.rel (%p1478) target = $region60
      $region59: #{tpu_custom_call.1} parent=5 // pred_region
        %s1481 = ssub.s32 %s17, 2
        // Predicated region
        $region61: #{tpu_custom_call.1} parent=59 // pred_check
          %p1482 = pneg %p224
        $region62: #{tpu_custom_call.1} parent=59 // pred_check_branch
          %1484 = sbr.rel (%p1482) target = $region64
        $region63: #{tpu_custom_call.1} parent=59 // pred_region
          %s1485 = sand.u32 %s209, 1
          %s1486 = scalar_lea.sflag [#allocation3], %s1485
          %s1487 = sand.u32 %s209, 1
          %s1488 = smul.addr %s1487, 64
          %s1489 = scalar_lea.vmem [#allocation2], %s1488
          %1490 = dma.done %s1486, 1024
        $region64: #{tpu_custom_call.1} parent=59 // pred_fallthru
          _
      $region60: #{tpu_custom_call.1} parent=5 // pred_fallthru
        _
    $region6: #{tpu_custom_call.1} parent=1 // loop_footer
      %s21 = sadd.s32 1, %s17
    $region7: #{tpu_custom_call.1} parent=1 // loop_footer_branch
      %16 = sbr.rel target = $region3
    $region8: #{tpu_custom_call.1} parent=1 // loop_exit
      _
    %1491 = vsyncpa [#allocation3], 1
    %s1492 = scalar_lea.sflag [#allocation3], 1
    %1493 = vsyncpa %s1492, 1

</llo_original>
